<compile_context>
chip_gen: v7x
topology: tpu7x:2x2x1
jax: 0.10.0
libtpu: 0.0.40
codegen_flags: <defaults>
</compile_context>

<pallas_src>
import numpy as np
import jax
import jax.numpy as jnp
from jax.experimental import pallas as pl
from jax.experimental.pallas import tpu as pltpu

# ----------------------- hyper-parameters (small, synthetic) -----------------------
E   = 32    # embedding_dim
H   = 4     # head_num
D   = 8     # qkv_dim
MS  = 16    # ms_hidden_dim (mixed-score MLP hidden width)
FF  = 64    # ff_hidden_dim
FFE = 16    # hidden width of the edge feed-forward
EPS = 1e-5  # InstanceNorm eps

B, R, C = 2, 8, 8   # batch, row_cnt, col_cnt

HD  = H * D          # 32
HC  = H * C          # 32
HMC = H * MS * C     # 512


# ------------------------------- Pallas kernel --------------------------------------
# One grid step == one batch instance.  Everything lives in vregs; no scratch.
def _encoding_block_kernel(
    row_ref, col_ref, cost_ref,
    w_in_ref, w_ms1_ref, w_ms2_ref, w_node_ref, w_ff1_ref, w_edge_ref, aux_ref,
    out_ref,
):
    f32 = jnp.float32
    row  = row_ref[...]                       # (R, E)
    col  = col_ref[...]                       # (C, E)
    cost = cost_ref[...]                      # (R, C)

    # ---- Q/K/V projections (1/sqrt(D) pre-folded into the Wq columns) ----
    q = jnp.dot(row, w_in_ref[:, 0:HD],        preferred_element_type=f32)   # (R, H*D)
    k = jnp.dot(col, w_in_ref[:, HD:2 * HD],   preferred_element_type=f32)   # (C, H*D)
    v = jnp.dot(col, w_in_ref[:, 2 * HD:3 * HD], preferred_element_type=f32) # (C, H*D)

    # ---- head-block-diagonal K / V slabs: attention becomes 2 MXU matmuls ----
    head_mask = aux_ref[:, 0:HD]                               # (H*C, H*D) kron(I_H, 1_{C,D})
    k_blk = jnp.concatenate([k] * H, axis=0) * head_mask       # (H*C, H*D)
    v_blk = jnp.concatenate([v] * H, axis=0) * head_mask       # (H*C, H*D)

    # scaled dot scores for all heads: (R, H*C), column index = h*C + c
    scores = jax.lax.dot_general(q, k_blk, (((1,), (1,)), ((), ())),
                                 preferred_element_type=f32)

    # ---- mixed-score MLP (all heads) as two block-structured MXU matmuls ----
    # TODO(synk): at production C the block weights are ~97% zeros and hid is (R, H*MS*C);
    #             re-express per-head / tile along C and set vmem_limit_bytes (v7x: 64 MiB VMEM).
    sc_cost = jnp.concatenate([scores, cost], axis=1)          # (R, H*C + C)
    w1  = w_ms1_ref[0:HC + C, :]                               # (H*C + C, H*MS*C)
    b1  = w_ms1_ref[HC + C:HC + C + 1, :]                      # (1, H*MS*C)
    hid = jnp.maximum(jnp.dot(sc_cost, w1, preferred_element_type=f32) + b1, 0.0)

    g2  = w_ms2_ref[0:HMC, :]                                  # (H*MS*C, H*C)
    b2  = w_ms2_ref[HMC:HMC + 1, :]                            # (1, H*C)
    mixed = jnp.dot(hid, g2, preferred_element_type=f32) + b2  # (R, H*C)

    # ---- edge contribution: sum of pre-softmax mixed scores over heads (one matmul) ----
    head_sum_m = aux_ref[:, HD + H:HD + H + C]                 # (H*C, C) vstack of I_C
    edge_sum = jnp.dot(mixed, head_sum_m, preferred_element_type=f32)        # (R, C)

    # ---- fused per-head softmax ----
    hsum = aux_ref[:, HD:HD + H]                               # (H*C, H) block-ones
    m  = jnp.max(mixed, axis=-1, keepdims=True)                # per-row shift (softmax-invariant)
    ex = jnp.exp(mixed - m)                                    # (R, H*C) one EUP pass
    denom = jnp.dot(ex, hsum, preferred_element_type=f32)      # (R, H) per-head sums
    recip = pl.reciprocal(denom)                               # exact (review correctness note)
    recip_b = jax.lax.dot_general(recip, hsum, (((1,), (1,)), ((), ())),
                                  preferred_element_type=f32)  # (R, H*C) per-head broadcast
    wts = ex * recip_b

    # attention output, all heads at once
    out_cat = jnp.dot(wts, v_blk, preferred_element_type=f32)  # (R, H*D)

    # ---- node path: combine, Add&InstanceNorm, FeedForward, Add&InstanceNorm ----
    wcmb = w_node_ref[0:HD, :]                                 # (H*D, E)
    wff2 = w_node_ref[HD:HD + FF, :]                           # (FF, E)
    cb   = w_node_ref[HD + FF + 0:HD + FF + 1, :]
    n1g  = w_node_ref[HD + FF + 1:HD + FF + 2, :]
    n1b  = w_node_ref[HD + FF + 2:HD + FF + 3, :]
    n2g  = w_node_ref[HD + FF + 3:HD + FF + 4, :]
    n2b  = w_node_ref[HD + FF + 4:HD + FF + 5, :]
    fb2  = w_node_ref[HD + FF + 5:HD + FF + 6, :]

    mh_out = jnp.dot(out_cat, wcmb, preferred_element_type=f32) + cb         # (R, E)

    def inst_norm_node(x, g, bta):
        # InstanceNorm1d over the problem(row) axis of this batch block, per channel
        mean = jnp.mean(x, axis=0, keepdims=True)
        cen  = x - mean
        var  = jnp.mean(cen * cen, axis=0, keepdims=True)
        return cen * jax.lax.rsqrt(var + EPS) * g + bta

    out1 = inst_norm_node(row + mh_out, n1g, n1b)

    wff1 = w_ff1_ref[0:E, :]                                   # (E, FF)
    fb1  = w_ff1_ref[E:E + 1, :]                               # (1, FF)
    hid_n = jnp.maximum(jnp.dot(out1, wff1, preferred_element_type=f32) + fb1, 0.0)
    ff_o  = jnp.dot(hid_n, wff2, preferred_element_type=f32) + fb2
    out_node = inst_norm_node(out1 + ff_o, n2g, n2b)           # (R, E)

    # ---- edge path: Add&InstanceNorm(1), FF(1->FFE->1), Add&InstanceNorm(1) ----
    ge1   = w_edge_ref[0:C, :]                                 # (C, FFE*C)
    ge2t  = w_edge_ref[C:2 * C, :]                             # (C, FFE*C) (layer 2, transposed)
    be1   = w_edge_ref[2 * C:2 * C + 1, :]                     # (1, FFE*C)
    n1e_g = w_edge_ref[2 * C + 1:2 * C + 2, 0:C]               # (1, C) broadcast scalar rows
    n1e_b = w_edge_ref[2 * C + 2:2 * C + 3, 0:C]
    fe_b2 = w_edge_ref[2 * C + 3:2 * C + 4, 0:C]
    n2e_g = w_edge_ref[2 * C + 4:2 * C + 5, 0:C]
    n2e_b = w_edge_ref[2 * C + 5:2 * C + 6, 0:C]

    def inst_norm_edge(x, g, bta):
        # per-batch normalization over all R*C entries
        s    = jnp.sum(x, axis=-1, keepdims=True)
        mean = jnp.sum(s, axis=0, keepdims=True) * (1.0 / (R * C))
        cen  = x - mean
        s2   = jnp.sum(cen * cen, axis=-1, keepdims=True)
        var  = jnp.sum(s2, axis=0, keepdims=True) * (1.0 / (R * C))
        return cen * jax.lax.rsqrt(var + EPS) * g + bta

    out1_e = inst_norm_edge(cost + edge_sum, n1e_g, n1e_b)                   # (R, C)

    hid_e  = jnp.maximum(jnp.dot(out1_e, ge1, preferred_element_type=f32) + be1, 0.0)
    out2_e = jax.lax.dot_general(hid_e, ge2t, (((1,), (1,)), ((), ())),
                                 preferred_element_type=f32) + fe_b2         # (R, C)
    out_edge = inst_norm_edge(out1_e + out2_e, n2e_g, n2e_b)                 # (R, C)

    # ---- single lane-packed store: [node | edge] ----
    out_ref[...] = jnp.concatenate([out_node, out_edge], axis=1)             # (R, E + C)


# ------------------------------- host-side packing (called ONCE at init) -------------
def pack_params(p):
    f32 = jnp.float32
    i_h = jnp.eye(H, dtype=f32)
    i_c = jnp.eye(C, dtype=f32)
    inv_sqrt_d = 1.0 / np.sqrt(D)

    # q/k/v projection, pre-transposed & concatenated along lanes; 1/sqrt(D) folded into Wq
    w_in = jnp.concatenate([p['wq'].T * inv_sqrt_d, p['wk'].T, p['wv'].T], axis=1)   # (E, 3*H*D)

    # mixed-score MLP -> block-structured matmul weights, hidden column (h*MS+m)*C + c
    w1a = p['m1w'][:, 0, :]                                                   # (H, MS)
    w1b = p['m1w'][:, 1, :]                                                   # (H, MS)
    ga = (i_h[:, None, :, None, None] * w1a[None, None, :, :, None]
          * i_c[None, :, None, None, :]).reshape(HC, HMC)                     # (H*C, H*MS*C)
    gb = (w1b[None, :, :, None] * i_c[:, None, None, :]).reshape(C, HMC)      # (C, H*MS*C)
    b1r = jnp.repeat(p['m1b'].reshape(H * MS), C).reshape(1, HMC)
    w_ms1 = jnp.concatenate([ga, gb, b1r], axis=0)                            # (HC+C+1, HMC)

    g2 = (p['m2w'][:, :, None, None, None] * i_h[:, None, None, :, None]
          * i_c[None, None, :, None, :]).reshape(HMC, HC)                     # (H*MS*C, H*C)
    b2r = jnp.repeat(p['m2b'][:, 0], C).reshape(1, HC)
    w_ms2 = jnp.concatenate([g2, b2r], axis=0)                                # (HMC+1, HC)

    # node-path weights (pre-transposed) + per-channel vectors, packed along sublanes
    w_node = jnp.concatenate([p['cw'].T, p['fw2'].T,
                              p['cb'], p['n1g'], p['n1b'],
                              p['n2g'], p['n2b'], p['fb2']], axis=0)          # (HD+FF+6, E)
    w_ff1p = jnp.concatenate([p['fw1'].T, p['fb1']], axis=0)                  # (E+1, FF)

    # edge FFN -> block-structured matmul weights, hidden col = m*C + c; + scalar rows
    ge1  = (p['ew1'][0][None, :, None] * i_c[:, None, :]).reshape(C, FFE * C)
    ge2t = (p['ew2'][0][None, :, None] * i_c[:, None, :]).reshape(C, FFE * C)
    be1  = jnp.repeat(p['eb1'][0], C).reshape(1, FFE * C)
    scal_rows = jnp.broadcast_to(p['escal'], (5, FFE * C)).astype(f32)        # scalars, lane-broadcast
    w_edge = jnp.concatenate([ge1, ge2t, be1, scal_rows], axis=0)             # (2C+6, FFE*C)

    # attention auxiliaries (head-block masks / block-ones reducers), shared sublane axis H*C
    head_mask = jnp.kron(i_h, jnp.ones((C, D), f32))                          # (H*C, H*D)
    hsum      = jnp.kron(i_h, jnp.ones((C, 1), f32))                          # (H*C, H)
    head_sum  = jnp.kron(jnp.ones((H, 1), f32), i_c)                          # (H*C, C)
    aux = jnp.concatenate([head_mask, hsum, head_sum], axis=1)                # (H*C, H*D+H+C)

    return (w_in, w_ms1, w_ms2, w_node, w_ff1p, w_edge, aux)


# ------------------------------- wrapper (glue) --------------------------------------
@jax.jit
def encoding_block(row_emb, col_emb, cost_mat, packed):
    w_in, w_ms1, w_ms2, w_node, w_ff1p, w_edge, aux = packed
    bx, rx, ex = row_emb.shape
    cx = col_emb.shape[1]

    row2  = row_emb.reshape(bx * rx, ex)
    col2  = col_emb.reshape(bx * cx, ex)
    cost2 = cost_mat.reshape(bx * rx, cx)

    def const_spec(a):
        return pl.BlockSpec(a.shape, lambda b: (0, 0))

    out = pl.pallas_call(
        _encoding_block_kernel,
        grid=(bx,),
        out_shape=jax.ShapeDtypeStruct((bx * rx, ex + cx), jnp.float32),
        in_specs=[
            pl.BlockSpec((rx, ex), lambda b: (b, 0)),        # row_emb block (this batch)
            pl.BlockSpec((cx, ex), lambda b: (b, 0)),        # col_emb block
            pl.BlockSpec((rx, cx), lambda b: (b, 0)),        # cost block
            const_spec(w_in), const_spec(w_ms1), const_spec(w_ms2),
            const_spec(w_node), const_spec(w_ff1p), const_spec(w_edge),
            const_spec(aux),
        ],
        out_specs=pl.BlockSpec((rx, ex + cx), lambda b: (b, 0)),
        compiler_params=pltpu.CompilerParams(dimension_semantics=("parallel",)),
    )(row2, col2, cost2, w_in, w_ms1, w_ms2, w_node, w_ff1p, w_edge, aux)

    out_node = out[:, :ex].reshape(bx, rx, ex)
    out_edge = out[:, ex:].reshape(bx, rx, cx)
    return out_node, out_edge


# ------------------------------ parameters (deterministic) ---------------------------
def make_params(key):
    ks = jax.random.split(key, 24)

    def u(k, shape, scale):
        return jax.random.uniform(k, shape, jnp.float32, -1.0, 1.0) * scale

    s_e, s_hd, s_ff = 1.0 / np.sqrt(E), 1.0 / np.sqrt(H * D), 1.0 / np.sqrt(FF)
    p = {
        'wq':  u(ks[0], (H * D, E), s_e),
        'wk':  u(ks[1], (H * D, E), s_e),
        'wv':  u(ks[2], (H * D, E), s_e),
        'm1w': u(ks[3], (H, 2, MS), np.sqrt(0.5)),
        'm1b': u(ks[4], (H, MS),    np.sqrt(0.5)),
        'm2w': u(ks[5], (H, MS),    np.sqrt(1.0 / 16)),
        'm2b': u(ks[6], (H, 1),     np.sqrt(1.0 / 16)),
        'cw':  u(ks[7], (E, H * D), s_hd),
        'cb':  u(ks[8], (1, E), s_hd),
        'n1g': 1.0 + u(ks[9], (1, E), 0.1),
        'n1b': u(ks[10], (1, E), 0.1),
        'fw1': u(ks[11], (FF, E), s_e),
        'fb1': u(ks[12], (1, FF), s_e),
        'fw2': u(ks[13], (E, FF), s_ff),
        'fb2': u(ks[14], (1, E), s_ff),
        'n2g': 1.0 + u(ks[15], (1, E), 0.1),
        'n2b': u(ks[16], (1, E), 0.1),
        'ew1': u(ks[17], (1, FFE), 1.0),                  # Linear(1, FFE).weight -> (1, FFE)
        'eb1': u(ks[18], (1, FFE), 1.0),
        'ew2': u(ks[19], (1, FFE), 1.0 / np.sqrt(FFE)),   # Linear(FFE, 1).weight -> (1, FFE)
    }
    sc = u(ks[20], (5,), 0.1)
    # [norm1_edge_gamma, norm1_edge_beta, ffe_W2_bias, norm2_edge_gamma, norm2_edge_beta]
    p['escal'] = jnp.stack([1.0 + sc[0], sc[1], sc[2], 1.0 + sc[3], sc[4]]).reshape(5, 1).astype(jnp.float32)
    return p


# ------------------------------ pure-JAX reference -----------------------------------
def reference(row_emb, col_emb, cost_mat, p):
    bx, rx, ex = row_emb.shape

    def heads(x):
        return x.reshape(bx, -1, H, D).transpose(0, 2, 1, 3)

    q = heads(row_emb @ p['wq'].T)
    k = heads(col_emb @ p['wk'].T)
    v = heads(col_emb @ p['wv'].T)
    dot = jnp.einsum('bhrd,bhcd->bhrc', q, k) / np.sqrt(D)
    cost_b = jnp.broadcast_to(cost_mat[:, None], dot.shape)
    two = jnp.stack([dot, cost_b], axis=-1)
    ms1 = jax.nn.relu(jnp.einsum('bhrct,htm->bhrcm', two, p['m1w']) + p['m1b'][None, :, None, None, :])
    mixed = jnp.einsum('bhrcm,hm->bhrc', ms1, p['m2w']) + p['m2b'][None, :, None, :]
    wts = jax.nn.softmax(mixed, axis=-1)
    out = jnp.einsum('bhrc,bhcd->bhrd', wts, v)
    out_concat = out.transpose(0, 2, 1, 3).reshape(bx, rx, H * D)
    mh = out_concat @ p['cw'].T + p['cb'][0]

    def inorm(x, g, bta):
        mean = x.mean(axis=1, keepdims=True)
        var = ((x - mean) ** 2).mean(axis=1, keepdims=True)
        return (x - mean) / jnp.sqrt(var + EPS) * g[0] + bta[0]

    out1 = inorm(row_emb + mh, p['n1g'], p['n1b'])
    ffo = jax.nn.relu(out1 @ p['fw1'].T + p['fb1'][0]) @ p['fw2'].T + p['fb2'][0]
    out3 = inorm(out1 + ffo, p['n2g'], p['n2b'])

    es = p['escal'][:, 0]
    added_e = cost_mat + mixed.sum(axis=1)

    def inorm_e(x, g, bta):
        mean = x.mean(axis=(1, 2), keepdims=True)
        var = ((x - mean) ** 2).mean(axis=(1, 2), keepdims=True)
        return (x - mean) / jnp.sqrt(var + EPS) * g + bta

    out1e = inorm_e(added_e, es[0], es[1])
    he = jax.nn.relu(out1e[..., None] * p['ew1'][0] + p['eb1'][0])
    out2e = (he * p['ew2'][0]).sum(-1) + es[2]
    out3e = inorm_e(out1e + out2e, es[3], es[4])
    return out3, out3e


# -------------------------------------- main -----------------------------------------
if __name__ == "__main__":
    key = jax.random.PRNGKey(0)
    k1, k2, k3, kp = jax.random.split(key, 4)
    row_emb  = jax.random.normal(k1, (B, R, E), jnp.float32)
    col_emb  = jax.random.normal(k2, (B, C, E), jnp.float32)
    cost_mat = jax.random.uniform(k3, (B, R, C), jnp.float32)

    params = make_params(kp)
    packed = pack_params(params)   # packed ONCE at init; not part of the per-call jit path

    out3, out3_edge = jax.block_until_ready(encoding_block(row_emb, col_emb, cost_mat, packed))

    ref3, ref3_edge = jax.block_until_ready(reference(row_emb, col_emb, cost_mat, params))
    assert out3.shape == (B, R, E) and out3_edge.shape == (B, R, C)
    np.testing.assert_allclose(np.asarray(out3), np.asarray(ref3), rtol=2e-2, atol=2e-2)
    np.testing.assert_allclose(np.asarray(out3_edge), np.asarray(ref3_edge), rtol=2e-2, atol=2e-2)

    print("KERNEL_OK")
</pallas_src>

<mosaic_0001>
module attributes {stable_mosaic.version = 11 : i64} {
  func.func @_encoding_block_kernel(%arg0: i32, %arg1: memref<8x32xf32, #tpu.memory_space<vmem>>, %arg2: memref<8x32xf32, #tpu.memory_space<vmem>>, %arg3: memref<8x8xf32, #tpu.memory_space<vmem>>, %arg4: memref<32x96xf32, #tpu.memory_space<vmem>>, %arg5: memref<41x512xf32, #tpu.memory_space<vmem>>, %arg6: memref<513x32xf32, #tpu.memory_space<vmem>>, %arg7: memref<102x32xf32, #tpu.memory_space<vmem>>, %arg8: memref<33x64xf32, #tpu.memory_space<vmem>>, %arg9: memref<22x128xf32, #tpu.memory_space<vmem>>, %arg10: memref<32x44xf32, #tpu.memory_space<vmem>>, %arg11: memref<8x40xf32, #tpu.memory_space<vmem>>) attributes {dimension_semantics = [#tpu.dimension_semantics<parallel>], iteration_bounds = array<i64: 2>, scalar_prefetch = 0 : i64, scratch_operands = 0 : i64, tpu.core_type = #tpu.core_type<tc>, window_params = [{transform_indices = @transform_0, window_bounds = array<i64: 8, 32>}, {transform_indices = @transform_1, window_bounds = array<i64: 8, 32>}, {transform_indices = @transform_2, window_bounds = array<i64: 8, 8>}, {pipeline_mode = #tpu.pipeline_mode<synchronous>, transform_indices = @transform_3, window_bounds = array<i64: 32, 96>}, {pipeline_mode = #tpu.pipeline_mode<synchronous>, transform_indices = @transform_4, window_bounds = array<i64: 41, 512>}, {pipeline_mode = #tpu.pipeline_mode<synchronous>, transform_indices = @transform_5, window_bounds = array<i64: 513, 32>}, {pipeline_mode = #tpu.pipeline_mode<synchronous>, transform_indices = @transform_6, window_bounds = array<i64: 102, 32>}, {pipeline_mode = #tpu.pipeline_mode<synchronous>, transform_indices = @transform_7, window_bounds = array<i64: 33, 64>}, {pipeline_mode = #tpu.pipeline_mode<synchronous>, transform_indices = @transform_8, window_bounds = array<i64: 22, 128>}, {pipeline_mode = #tpu.pipeline_mode<synchronous>, transform_indices = @transform_9, window_bounds = array<i64: 32, 44>}, {transform_indices = @transform_10, window_bounds = array<i64: 8, 40>}]} {
    %c0 = arith.constant 0 : index
    %c0_0 = arith.constant 0 : index
    %0 = vector.load %arg1[%c0, %c0_0] : memref<8x32xf32, #tpu.memory_space<vmem>>, vector<8x32xf32>
    %c0_1 = arith.constant 0 : index
    %c0_2 = arith.constant 0 : index
    %1 = vector.load %arg2[%c0_1, %c0_2] : memref<8x32xf32, #tpu.memory_space<vmem>>, vector<8x32xf32>
    %c0_3 = arith.constant 0 : index
    %c0_4 = arith.constant 0 : index
    %2 = vector.load %arg3[%c0_3, %c0_4] : memref<8x8xf32, #tpu.memory_space<vmem>>, vector<8x8xf32>
    %c0_5 = arith.constant 0 : index
    %c0_6 = arith.constant 0 : index
    %3 = vector.load %arg4[%c0_5, %c0_6] : memref<32x96xf32, #tpu.memory_space<vmem>>, vector<32x32xf32>
    %cst = arith.constant dense<0.000000e+00> : vector<8x32xf32>
    %4 = tpu.matmul %0, %3, %cst {dimension_numbers = #tpu.dot_dimension_numbers<[1], [0], [0], [1], [0, 0, 1, 1], [], []>} : vector<8x32xf32>, vector<32x32xf32>, vector<8x32xf32> -> vector<8x32xf32>
    %c0_7 = arith.constant 0 : index
    %c32 = arith.constant 32 : index
    %5 = vector.load %arg4[%c0_7, %c32] : memref<32x96xf32, #tpu.memory_space<vmem>>, vector<32x32xf32>
    %cst_8 = arith.constant dense<0.000000e+00> : vector<8x32xf32>
    %6 = tpu.matmul %1, %5, %cst_8 {dimension_numbers = #tpu.dot_dimension_numbers<[1], [0], [0], [1], [0, 0, 1, 1], [], []>} : vector<8x32xf32>, vector<32x32xf32>, vector<8x32xf32> -> vector<8x32xf32>
    %c0_9 = arith.constant 0 : index
    %c64 = arith.constant 64 : index
    %7 = vector.load %arg4[%c0_9, %c64] : memref<32x96xf32, #tpu.memory_space<vmem>>, vector<32x32xf32>
    %cst_10 = arith.constant dense<0.000000e+00> : vector<8x32xf32>
    %8 = tpu.matmul %1, %7, %cst_10 {dimension_numbers = #tpu.dot_dimension_numbers<[1], [0], [0], [1], [0, 0, 1, 1], [], []>} : vector<8x32xf32>, vector<32x32xf32>, vector<8x32xf32> -> vector<8x32xf32>
    %c0_11 = arith.constant 0 : index
    %c0_12 = arith.constant 0 : index
    %9 = vector.load %arg10[%c0_11, %c0_12] : memref<32x44xf32, #tpu.memory_space<vmem>>, vector<32x32xf32>
    %10 = tpu.concatenate %6, %6, %6, %6 in 0 : vector<8x32xf32>, vector<8x32xf32>, vector<8x32xf32>, vector<8x32xf32> -> vector<32x32xf32>
    %11 = arith.mulf %10, %9 : vector<32x32xf32>
    %12 = tpu.concatenate %8, %8, %8, %8 in 0 : vector<8x32xf32>, vector<8x32xf32>, vector<8x32xf32>, vector<8x32xf32> -> vector<32x32xf32>
    %13 = arith.mulf %12, %9 : vector<32x32xf32>
    %cst_13 = arith.constant dense<0.000000e+00> : vector<8x32xf32>
    %14 = tpu.matmul %4, %11, %cst_13 {dimension_numbers = #tpu.dot_dimension_numbers<[1], [1], [0], [0], [0, 0, 1, 0], [], []>} : vector<8x32xf32>, vector<32x32xf32>, vector<8x32xf32> -> vector<8x32xf32>
    %15 = tpu.concatenate %14, %2 in 1 : vector<8x32xf32>, vector<8x8xf32> -> vector<8x40xf32>
    %c0_14 = arith.constant 0 : index
    %c0_15 = arith.constant 0 : index
    %16 = vector.load %arg5[%c0_14, %c0_15] : memref<41x512xf32, #tpu.memory_space<vmem>>, vector<40x512xf32>
    %c40 = arith.constant 40 : index
    %c0_16 = arith.constant 0 : index
    %17 = vector.load %arg5[%c40, %c0_16] : memref<41x512xf32, #tpu.memory_space<vmem>>, vector<1x512xf32>
    %cst_17 = arith.constant dense<0.000000e+00> : vector<8x512xf32>
    %18 = tpu.matmul %15, %16, %cst_17 {dimension_numbers = #tpu.dot_dimension_numbers<[1], [0], [0], [1], [0, 0, 1, 1], [], []>} : vector<8x40xf32>, vector<40x512xf32>, vector<8x512xf32> -> vector<8x512xf32>
    %19 = vector.broadcast %17 : vector<1x512xf32> to vector<8x512xf32>
    %20 = arith.addf %18, %19 : vector<8x512xf32>
    %cst_18 = arith.constant 0.000000e+00 : f32
    %21 = vector.broadcast %cst_18 : f32 to vector<8x512xf32>
    %22 = arith.maximumf %20, %21 : vector<8x512xf32>
    %c0_19 = arith.constant 0 : index
    %c0_20 = arith.constant 0 : index
    %23 = vector.load %arg6[%c0_19, %c0_20] : memref<513x32xf32, #tpu.memory_space<vmem>>, vector<512x32xf32>
    %c512 = arith.constant 512 : index
    %c0_21 = arith.constant 0 : index
    %24 = vector.load %arg6[%c512, %c0_21] : memref<513x32xf32, #tpu.memory_space<vmem>>, vector<1x32xf32>
    %cst_22 = arith.constant dense<0.000000e+00> : vector<8x32xf32>
    %25 = tpu.matmul %22, %23, %cst_22 {dimension_numbers = #tpu.dot_dimension_numbers<[1], [0], [0], [1], [0, 0, 1, 1], [], []>} : vector<8x512xf32>, vector<512x32xf32>, vector<8x32xf32> -> vector<8x32xf32>
    %26 = vector.broadcast %24 : vector<1x32xf32> to vector<8x32xf32>
    %27 = arith.addf %25, %26 : vector<8x32xf32>
    %c0_23 = arith.constant 0 : index
    %c36 = arith.constant 36 : index
    %28 = vector.load %arg10[%c0_23, %c36] : memref<32x44xf32, #tpu.memory_space<vmem>>, vector<32x8xf32>
    %cst_24 = arith.constant dense<0.000000e+00> : vector<8x8xf32>
    %29 = tpu.matmul %27, %28, %cst_24 {dimension_numbers = #tpu.dot_dimension_numbers<[1], [0], [0], [1], [0, 0, 1, 1], [], []>} : vector<8x32xf32>, vector<32x8xf32>, vector<8x8xf32> -> vector<8x8xf32>
    %c0_25 = arith.constant 0 : index
    %c32_26 = arith.constant 32 : index
    %30 = vector.load %arg10[%c0_25, %c32_26] : memref<32x44xf32, #tpu.memory_space<vmem>>, vector<32x4xf32>
    %cst_27 = arith.constant dense<0xFF800000> : vector<8xf32>
    %31 = vector.multi_reduction <maximumf>, %27, %cst_27 [1] : vector<8x32xf32> to vector<8xf32>
    %32 = vector.shape_cast %31 : vector<8xf32> to vector<8x1xf32>
    %33 = vector.broadcast %32 : vector<8x1xf32> to vector<8x32xf32>
    %34 = arith.subf %27, %33 : vector<8x32xf32>
    %35 = math.exp %34 : vector<8x32xf32>
    %cst_28 = arith.constant dense<0.000000e+00> : vector<8x4xf32>
    %36 = tpu.matmul %35, %30, %cst_28 {dimension_numbers = #tpu.dot_dimension_numbers<[1], [0], [0], [1], [0, 0, 1, 1], [], []>} : vector<8x32xf32>, vector<32x4xf32>, vector<8x4xf32> -> vector<8x4xf32>
    %37 = tpu.reciprocal %36 : vector<8x4xf32> -> vector<8x4xf32>
    %cst_29 = arith.constant dense<0.000000e+00> : vector<8x32xf32>
    %38 = tpu.matmul %37, %30, %cst_29 {dimension_numbers = #tpu.dot_dimension_numbers<[1], [1], [0], [0], [0, 0, 1, 0], [], []>} : vector<8x4xf32>, vector<32x4xf32>, vector<8x32xf32> -> vector<8x32xf32>
    %39 = arith.mulf %35, %38 : vector<8x32xf32>
    %cst_30 = arith.constant dense<0.000000e+00> : vector<8x32xf32>
    %40 = tpu.matmul %39, %13, %cst_30 {dimension_numbers = #tpu.dot_dimension_numbers<[1], [0], [0], [1], [0, 0, 1, 1], [], []>} : vector<8x32xf32>, vector<32x32xf32>, vector<8x32xf32> -> vector<8x32xf32>
    %c0_31 = arith.constant 0 : index
    %c0_32 = arith.constant 0 : index
    %41 = vector.load %arg7[%c0_31, %c0_32] : memref<102x32xf32, #tpu.memory_space<vmem>>, vector<32x32xf32>
    %c32_33 = arith.constant 32 : index
    %c0_34 = arith.constant 0 : index
    %42 = vector.load %arg7[%c32_33, %c0_34] : memref<102x32xf32, #tpu.memory_space<vmem>>, vector<64x32xf32>
    %c96 = arith.constant 96 : index
    %c0_35 = arith.constant 0 : index
    %43 = vector.load %arg7[%c96, %c0_35] : memref<102x32xf32, #tpu.memory_space<vmem>>, vector<1x32xf32>
    %c97 = arith.constant 97 : index
    %c0_36 = arith.constant 0 : index
    %44 = vector.load %arg7[%c97, %c0_36] : memref<102x32xf32, #tpu.memory_space<vmem>>, vector<1x32xf32>
    %c98 = arith.constant 98 : index
    %c0_37 = arith.constant 0 : index
    %45 = vector.load %arg7[%c98, %c0_37] : memref<102x32xf32, #tpu.memory_space<vmem>>, vector<1x32xf32>
    %c99 = arith.constant 99 : index
    %c0_38 = arith.constant 0 : index
    %46 = vector.load %arg7[%c99, %c0_38] : memref<102x32xf32, #tpu.memory_space<vmem>>, vector<1x32xf32>
    %c100 = arith.constant 100 : index
    %c0_39 = arith.constant 0 : index
    %47 = vector.load %arg7[%c100, %c0_39] : memref<102x32xf32, #tpu.memory_space<vmem>>, vector<1x32xf32>
    %c101 = arith.constant 101 : index
    %c0_40 = arith.constant 0 : index
    %48 = vector.load %arg7[%c101, %c0_40] : memref<102x32xf32, #tpu.memory_space<vmem>>, vector<1x32xf32>
    %cst_41 = arith.constant dense<0.000000e+00> : vector<8x32xf32>
    %49 = tpu.matmul %40, %41, %cst_41 {dimension_numbers = #tpu.dot_dimension_numbers<[1], [0], [0], [1], [0, 0, 1, 1], [], []>} : vector<8x32xf32>, vector<32x32xf32>, vector<8x32xf32> -> vector<8x32xf32>
    %50 = vector.broadcast %43 : vector<1x32xf32> to vector<8x32xf32>
    %51 = arith.addf %49, %50 : vector<8x32xf32>
    %52 = arith.addf %0, %51 : vector<8x32xf32>
    %cst_42 = arith.constant dense<0.000000e+00> : vector<32xf32>
    %53 = vector.multi_reduction <add>, %52, %cst_42 [0] : vector<8x32xf32> to vector<32xf32>
    %54 = vector.shape_cast %53 : vector<32xf32> to vector<1x32xf32>
    %cst_43 = arith.constant 8.000000e+00 : f32
    %55 = vector.broadcast %cst_43 : f32 to vector<1x32xf32>
    %56 = arith.divf %54, %55 : vector<1x32xf32>
    %57 = vector.broadcast %56 : vector<1x32xf32> to vector<8x32xf32>
    %58 = arith.subf %52, %57 : vector<8x32xf32>
    %59 = arith.mulf %58, %58 : vector<8x32xf32>
    %cst_44 = arith.constant dense<0.000000e+00> : vector<32xf32>
    %60 = vector.multi_reduction <add>, %59, %cst_44 [0] : vector<8x32xf32> to vector<32xf32>
    %61 = vector.shape_cast %60 : vector<32xf32> to vector<1x32xf32>
    %cst_45 = arith.constant 8.000000e+00 : f32
    %62 = vector.broadcast %cst_45 : f32 to vector<1x32xf32>
    %63 = arith.divf %61, %62 : vector<1x32xf32>
    %cst_46 = arith.constant 9.99999974E-6 : f32
    %64 = vector.broadcast %cst_46 : f32 to vector<1x32xf32>
    %65 = arith.addf %63, %64 : vector<1x32xf32>
    %66 = math.rsqrt %65 : vector<1x32xf32>
    %67 = vector.broadcast %66 : vector<1x32xf32> to vector<8x32xf32>
    %68 = arith.mulf %58, %67 : vector<8x32xf32>
    %69 = vector.broadcast %44 : vector<1x32xf32> to vector<8x32xf32>
    %70 = arith.mulf %68, %69 : vector<8x32xf32>
    %71 = vector.broadcast %45 : vector<1x32xf32> to vector<8x32xf32>
    %72 = arith.addf %70, %71 : vector<8x32xf32>
    %c0_47 = arith.constant 0 : index
    %c0_48 = arith.constant 0 : index
    %73 = vector.load %arg8[%c0_47, %c0_48] : memref<33x64xf32, #tpu.memory_space<vmem>>, vector<32x64xf32>
    %c32_49 = arith.constant 32 : index
    %c0_50 = arith.constant 0 : index
    %74 = vector.load %arg8[%c32_49, %c0_50] : memref<33x64xf32, #tpu.memory_space<vmem>>, vector<1x64xf32>
    %cst_51 = arith.constant dense<0.000000e+00> : vector<8x64xf32>
    %75 = tpu.matmul %72, %73, %cst_51 {dimension_numbers = #tpu.dot_dimension_numbers<[1], [0], [0], [1], [0, 0, 1, 1], [], []>} : vector<8x32xf32>, vector<32x64xf32>, vector<8x64xf32> -> vector<8x64xf32>
    %76 = vector.broadcast %74 : vector<1x64xf32> to vector<8x64xf32>
    %77 = arith.addf %75, %76 : vector<8x64xf32>
    %cst_52 = arith.constant 0.000000e+00 : f32
    %78 = vector.broadcast %cst_52 : f32 to vector<8x64xf32>
    %79 = arith.maximumf %77, %78 : vector<8x64xf32>
    %cst_53 = arith.constant dense<0.000000e+00> : vector<8x32xf32>
    %80 = tpu.matmul %79, %42, %cst_53 {dimension_numbers = #tpu.dot_dimension_numbers<[1], [0], [0], [1], [0, 0, 1, 1], [], []>} : vector<8x64xf32>, vector<64x32xf32>, vector<8x32xf32> -> vector<8x32xf32>
    %81 = vector.broadcast %48 : vector<1x32xf32> to vector<8x32xf32>
    %82 = arith.addf %80, %81 : vector<8x32xf32>
    %83 = arith.addf %72, %82 : vector<8x32xf32>
    %cst_54 = arith.constant dense<0.000000e+00> : vector<32xf32>
    %84 = vector.multi_reduction <add>, %83, %cst_54 [0] : vector<8x32xf32> to vector<32xf32>
    %85 = vector.shape_cast %84 : vector<32xf32> to vector<1x32xf32>
    %cst_55 = arith.constant 8.000000e+00 : f32
    %86 = vector.broadcast %cst_55 : f32 to vector<1x32xf32>
    %87 = arith.divf %85, %86 : vector<1x32xf32>
    %88 = vector.broadcast %87 : vector<1x32xf32> to vector<8x32xf32>
    %89 = arith.subf %83, %88 : vector<8x32xf32>
    %90 = arith.mulf %89, %89 : vector<8x32xf32>
    %cst_56 = arith.constant dense<0.000000e+00> : vector<32xf32>
    %91 = vector.multi_reduction <add>, %90, %cst_56 [0] : vector<8x32xf32> to vector<32xf32>
    %92 = vector.shape_cast %91 : vector<32xf32> to vector<1x32xf32>
    %cst_57 = arith.constant 8.000000e+00 : f32
    %93 = vector.broadcast %cst_57 : f32 to vector<1x32xf32>
    %94 = arith.divf %92, %93 : vector<1x32xf32>
    %cst_58 = arith.constant 9.99999974E-6 : f32
    %95 = vector.broadcast %cst_58 : f32 to vector<1x32xf32>
    %96 = arith.addf %94, %95 : vector<1x32xf32>
    %97 = math.rsqrt %96 : vector<1x32xf32>
    %98 = vector.broadcast %97 : vector<1x32xf32> to vector<8x32xf32>
    %99 = arith.mulf %89, %98 : vector<8x32xf32>
    %100 = vector.broadcast %46 : vector<1x32xf32> to vector<8x32xf32>
    %101 = arith.mulf %99, %100 : vector<8x32xf32>
    %102 = vector.broadcast %47 : vector<1x32xf32> to vector<8x32xf32>
    %103 = arith.addf %101, %102 : vector<8x32xf32>
    %c0_59 = arith.constant 0 : index
    %c0_60 = arith.constant 0 : index
    %104 = vector.load %arg9[%c0_59, %c0_60] : memref<22x128xf32, #tpu.memory_space<vmem>>, vector<8x128xf32>
    %c8 = arith.constant 8 : index
    %c0_61 = arith.constant 0 : index
    %105 = vector.load %arg9[%c8, %c0_61] : memref<22x128xf32, #tpu.memory_space<vmem>>, vector<8x128xf32>
    %c16 = arith.constant 16 : index
    %c0_62 = arith.constant 0 : index
    %106 = vector.load %arg9[%c16, %c0_62] : memref<22x128xf32, #tpu.memory_space<vmem>>, vector<1x128xf32>
    %c17 = arith.constant 17 : index
    %c0_63 = arith.constant 0 : index
    %107 = vector.load %arg9[%c17, %c0_63] : memref<22x128xf32, #tpu.memory_space<vmem>>, vector<1x8xf32>
    %c18 = arith.constant 18 : index
    %c0_64 = arith.constant 0 : index
    %108 = vector.load %arg9[%c18, %c0_64] : memref<22x128xf32, #tpu.memory_space<vmem>>, vector<1x8xf32>
    %c19 = arith.constant 19 : index
    %c0_65 = arith.constant 0 : index
    %109 = vector.load %arg9[%c19, %c0_65] : memref<22x128xf32, #tpu.memory_space<vmem>>, vector<1x8xf32>
    %c20 = arith.constant 20 : index
    %c0_66 = arith.constant 0 : index
    %110 = vector.load %arg9[%c20, %c0_66] : memref<22x128xf32, #tpu.memory_space<vmem>>, vector<1x8xf32>
    %c21 = arith.constant 21 : index
    %c0_67 = arith.constant 0 : index
    %111 = vector.load %arg9[%c21, %c0_67] : memref<22x128xf32, #tpu.memory_space<vmem>>, vector<1x8xf32>
    %112 = arith.addf %2, %29 : vector<8x8xf32>
    %cst_68 = arith.constant dense<0.000000e+00> : vector<8xf32>
    %113 = vector.multi_reduction <add>, %112, %cst_68 [1] : vector<8x8xf32> to vector<8xf32>
    %114 = vector.shape_cast %113 : vector<8xf32> to vector<8x1xf32>
    %cst_69 = arith.constant dense<0.000000e+00> : vector<1xf32>
    %115 = vector.multi_reduction <add>, %114, %cst_69 [0] : vector<8x1xf32> to vector<1xf32>
    %116 = vector.shape_cast %115 : vector<1xf32> to vector<1x1xf32>
    %cst_70 = arith.constant 1.562500e-02 : f32
    %117 = vector.broadcast %cst_70 : f32 to vector<1x1xf32>
    %118 = arith.mulf %116, %117 : vector<1x1xf32>
    %119 = vector.broadcast %118 : vector<1x1xf32> to vector<8x8xf32>
    %120 = arith.subf %112, %119 : vector<8x8xf32>
    %121 = arith.mulf %120, %120 : vector<8x8xf32>
    %cst_71 = arith.constant dense<0.000000e+00> : vector<8xf32>
    %122 = vector.multi_reduction <add>, %121, %cst_71 [1] : vector<8x8xf32> to vector<8xf32>
    %123 = vector.shape_cast %122 : vector<8xf32> to vector<8x1xf32>
    %cst_72 = arith.constant dense<0.000000e+00> : vector<1xf32>
    %124 = vector.multi_reduction <add>, %123, %cst_72 [0] : vector<8x1xf32> to vector<1xf32>
    %125 = vector.shape_cast %124 : vector<1xf32> to vector<1x1xf32>
    %cst_73 = arith.constant 1.562500e-02 : f32
    %126 = vector.broadcast %cst_73 : f32 to vector<1x1xf32>
    %127 = arith.mulf %125, %126 : vector<1x1xf32>
    %cst_74 = arith.constant 9.99999974E-6 : f32
    %128 = vector.broadcast %cst_74 : f32 to vector<1x1xf32>
    %129 = arith.addf %127, %128 : vector<1x1xf32>
    %130 = math.rsqrt %129 : vector<1x1xf32>
    %131 = vector.broadcast %130 : vector<1x1xf32> to vector<8x8xf32>
    %132 = arith.mulf %120, %131 : vector<8x8xf32>
    %133 = vector.broadcast %107 : vector<1x8xf32> to vector<8x8xf32>
    %134 = arith.mulf %132, %133 : vector<8x8xf32>
    %135 = vector.broadcast %108 : vector<1x8xf32> to vector<8x8xf32>
    %136 = arith.addf %134, %135 : vector<8x8xf32>
    %cst_75 = arith.constant dense<0.000000e+00> : vector<8x128xf32>
    %137 = tpu.matmul %136, %104, %cst_75 {dimension_numbers = #tpu.dot_dimension_numbers<[1], [0], [0], [1], [0, 0, 1, 1], [], []>} : vector<8x8xf32>, vector<8x128xf32>, vector<8x128xf32> -> vector<8x128xf32>
    %138 = vector.broadcast %106 : vector<1x128xf32> to vector<8x128xf32>
    %139 = arith.addf %137, %138 : vector<8x128xf32>
    %cst_76 = arith.constant 0.000000e+00 : f32
    %140 = vector.broadcast %cst_76 : f32 to vector<8x128xf32>
    %141 = arith.maximumf %139, %140 : vector<8x128xf32>
    %cst_77 = arith.constant dense<0.000000e+00> : vector<8x8xf32>
    %142 = tpu.matmul %141, %105, %cst_77 {dimension_numbers = #tpu.dot_dimension_numbers<[1], [1], [0], [0], [0, 0, 1, 0], [], []>} : vector<8x128xf32>, vector<8x128xf32>, vector<8x8xf32> -> vector<8x8xf32>
    %143 = vector.broadcast %109 : vector<1x8xf32> to vector<8x8xf32>
    %144 = arith.addf %142, %143 : vector<8x8xf32>
    %145 = arith.addf %136, %144 : vector<8x8xf32>
    %cst_78 = arith.constant dense<0.000000e+00> : vector<8xf32>
    %146 = vector.multi_reduction <add>, %145, %cst_78 [1] : vector<8x8xf32> to vector<8xf32>
    %147 = vector.shape_cast %146 : vector<8xf32> to vector<8x1xf32>
    %cst_79 = arith.constant dense<0.000000e+00> : vector<1xf32>
    %148 = vector.multi_reduction <add>, %147, %cst_79 [0] : vector<8x1xf32> to vector<1xf32>
    %149 = vector.shape_cast %148 : vector<1xf32> to vector<1x1xf32>
    %cst_80 = arith.constant 1.562500e-02 : f32
    %150 = vector.broadcast %cst_80 : f32 to vector<1x1xf32>
    %151 = arith.mulf %149, %150 : vector<1x1xf32>
    %152 = vector.broadcast %151 : vector<1x1xf32> to vector<8x8xf32>
    %153 = arith.subf %145, %152 : vector<8x8xf32>
    %154 = arith.mulf %153, %153 : vector<8x8xf32>
    %cst_81 = arith.constant dense<0.000000e+00> : vector<8xf32>
    %155 = vector.multi_reduction <add>, %154, %cst_81 [1] : vector<8x8xf32> to vector<8xf32>
    %156 = vector.shape_cast %155 : vector<8xf32> to vector<8x1xf32>
    %cst_82 = arith.constant dense<0.000000e+00> : vector<1xf32>
    %157 = vector.multi_reduction <add>, %156, %cst_82 [0] : vector<8x1xf32> to vector<1xf32>
    %158 = vector.shape_cast %157 : vector<1xf32> to vector<1x1xf32>
    %cst_83 = arith.constant 1.562500e-02 : f32
    %159 = vector.broadcast %cst_83 : f32 to vector<1x1xf32>
    %160 = arith.mulf %158, %159 : vector<1x1xf32>
    %cst_84 = arith.constant 9.99999974E-6 : f32
    %161 = vector.broadcast %cst_84 : f32 to vector<1x1xf32>
    %162 = arith.addf %160, %161 : vector<1x1xf32>
    %163 = math.rsqrt %162 : vector<1x1xf32>
    %164 = vector.broadcast %163 : vector<1x1xf32> to vector<8x8xf32>
    %165 = arith.mulf %153, %164 : vector<8x8xf32>
    %166 = vector.broadcast %110 : vector<1x8xf32> to vector<8x8xf32>
    %167 = arith.mulf %165, %166 : vector<8x8xf32>
    %168 = vector.broadcast %111 : vector<1x8xf32> to vector<8x8xf32>
    %169 = arith.addf %167, %168 : vector<8x8xf32>
    %170 = tpu.concatenate %103, %169 in 1 : vector<8x32xf32>, vector<8x8xf32> -> vector<8x40xf32>
    %c0_85 = arith.constant 0 : index
    %c0_86 = arith.constant 0 : index
    %171 = vector.load %arg11[%c0_85, %c0_86] : memref<8x40xf32, #tpu.memory_space<vmem>>, vector<8x40xf32>
    tpu.vector_store %arg11[%c0_85, %c0_86], %170 {strides = array<i32>} : memref<8x40xf32, #tpu.memory_space<vmem>>, vector<8x40xf32>,
    return
  }
  func.func @transform_0(%arg0: i32) -> (i32, i32) {
    %c0_i32 = arith.constant 0 : i32
    %c0_i32_0 = arith.constant 0 : i32
    return %arg0, %c0_i32 : i32, i32
  }
  func.func @transform_1(%arg0: i32) -> (i32, i32) {
    %c0_i32 = arith.constant 0 : i32
    %c0_i32_0 = arith.constant 0 : i32
    return %arg0, %c0_i32 : i32, i32
  }
  func.func @transform_2(%arg0: i32) -> (i32, i32) {
    %c0_i32 = arith.constant 0 : i32
    %c0_i32_0 = arith.constant 0 : i32
    return %arg0, %c0_i32 : i32, i32
  }
  func.func @transform_3(%arg0: i32) -> (i32, i32) {
    %c0_i32 = arith.constant 0 : i32
    %c0_i32_0 = arith.constant 0 : i32
    %c0_i32_1 = arith.constant 0 : i32
    return %c0_i32, %c0_i32_0 : i32, i32
  }
  func.func @transform_4(%arg0: i32) -> (i32, i32) {
    %c0_i32 = arith.constant 0 : i32
    %c0_i32_0 = arith.constant 0 : i32
    %c0_i32_1 = arith.constant 0 : i32
    return %c0_i32, %c0_i32_0 : i32, i32
  }
  func.func @transform_5(%arg0: i32) -> (i32, i32) {
    %c0_i32 = arith.constant 0 : i32
    %c0_i32_0 = arith.constant 0 : i32
    %c0_i32_1 = arith.constant 0 : i32
    return %c0_i32, %c0_i32_0 : i32, i32
  }
  func.func @transform_6(%arg0: i32) -> (i32, i32) {
    %c0_i32 = arith.constant 0 : i32
    %c0_i32_0 = arith.constant 0 : i32
    %c0_i32_1 = arith.constant 0 : i32
    return %c0_i32, %c0_i32_0 : i32, i32
  }
  func.func @transform_7(%arg0: i32) -> (i32, i32) {
    %c0_i32 = arith.constant 0 : i32
    %c0_i32_0 = arith.constant 0 : i32
    %c0_i32_1 = arith.constant 0 : i32
    return %c0_i32, %c0_i32_0 : i32, i32
  }
  func.func @transform_8(%arg0: i32) -> (i32, i32) {
    %c0_i32 = arith.constant 0 : i32
    %c0_i32_0 = arith.constant 0 : i32
    %c0_i32_1 = arith.constant 0 : i32
    return %c0_i32, %c0_i32_0 : i32, i32
  }
  func.func @transform_9(%arg0: i32) -> (i32, i32) {
    %c0_i32 = arith.constant 0 : i32
    %c0_i32_0 = arith.constant 0 : i32
    %c0_i32_1 = arith.constant 0 : i32
    return %c0_i32, %c0_i32_0 : i32, i32
  }
  func.func @transform_10(%arg0: i32) -> (i32, i32) {
    %c0_i32 = arith.constant 0 : i32
    %c0_i32_0 = arith.constant 0 : i32
    return %arg0, %c0_i32 : i32, i32
  }
}

</mosaic_0001>

<llo_original>
// kernel: encoding_block.1
$region0: #{encoding_block.1}
  #allocation0 [shape = 'u32[]', space=smem, size = 0x4, offset = 0x4, fixed_abs, tag = 'smem constant byte address 0x4 - core index']
  #allocation1 [shape = 'u32[144,128]{1,0:T(1,128)}', space=vmem, size = 0x12000, scoped, tag = 'internal scratch']
  %s0 = inlined_call_operand.vmem [shape: f32[16,32], index: 0, kind: input, shape index: {}]
  %s1 = inlined_call_operand.vmem [shape: f32[16,32], index: 1, kind: input, shape index: {}]
  %s2 = inlined_call_operand.vmem [shape: f32[16,8], index: 2, kind: input, shape index: {}]
  %s3 = inlined_call_operand.vmem [shape: f32[32,96], index: 3, kind: input, shape index: {}]
  %s4 = inlined_call_operand.vmem [shape: f32[41,512], index: 4, kind: input, shape index: {}]
  %s5 = inlined_call_operand.vmem [shape: f32[513,32], index: 5, kind: input, shape index: {}]
  %s6 = inlined_call_operand.vmem [shape: f32[102,32], index: 6, kind: input, shape index: {}]
  %s7 = inlined_call_operand.vmem [shape: f32[33,64], index: 7, kind: input, shape index: {}]
  %s8 = inlined_call_operand.vmem [shape: f32[22,128], index: 8, kind: input, shape index: {}]
  %s9 = inlined_call_operand.vmem [shape: f32[32,44], index: 9, kind: input, shape index: {}]
  %s10 = inlined_call_operand.vmem [shape: f32[16,40], index: 10, kind: output, shape index: {}]
  %s11 = sld [smem:[#allocation0]]
  $region73: #{encoding_block.1} parent=0
    _
  %s13 = ssub.s32 1, %s11
  %s14 = scalar_select 0, %s13, %s11
  loop: start=0, step=1, limit=4
  $region2: #{encoding_block.1} parent=0 // loop_pre_header
    _
  $region3: #{encoding_block.1} parent=0 // loop_header
    %s16 = sphi 0, %s20
    %p17 = scmp.ge.s32.totalorder %s16, 4
    %s26 = sphi 0, %s28
    %s29 = sphi 0, %s26
    %s30 = sphi 0, %s29
    %s46 = sphi 0, %s30
    %s52 = sphi 0, %s54
    %s55 = sphi 0, %s52
    %s56 = sphi 0, %s55
    %s72 = sphi 0, %s56
    %s78 = sphi 0, %s80
    %s81 = sphi 0, %s78
    %s82 = sphi 0, %s81
    %s98 = sphi 0, %s82
    %s102 = sphi 0, %s102
    %s104 = sphi 0, %s102
    %s105 = sphi 0, %s104
    %s119 = sphi 0, %s105
    %s123 = sphi 0, %s123
    %s125 = sphi 0, %s123
    %s126 = sphi 0, %s125
    %s140 = sphi 0, %s126
    %s144 = sphi 0, %s144
    %s146 = sphi 0, %s144
    %s147 = sphi 0, %s146
    %s161 = sphi 0, %s147
    %s165 = sphi 0, %s165
    %s167 = sphi 0, %s165
    %s168 = sphi 0, %s167
    %s182 = sphi 0, %s168
    %s186 = sphi 0, %s186
    %s188 = sphi 0, %s186
    %s189 = sphi 0, %s188
    %s203 = sphi 0, %s189
    %s207 = sphi 0, %s207
    %s209 = sphi 0, %s207
    %s210 = sphi 0, %s209
    %s224 = sphi 0, %s210
    %s228 = sphi 0, %s228
    %s230 = sphi 0, %s228
    %s231 = sphi 0, %s230
    %s245 = sphi 0, %s231
    %s251 = sphi 0, %s253
    %s254 = sphi 0, %s251
    %s255 = sphi 0, %s254
    %s271 = sphi 0, %s255
  $region4: #{encoding_block.1} parent=0 // loop_header_branch
    %19 = sbr.rel (%p17) target = $region8
  $region5: #{encoding_block.1} parent=0 // loop_body
    %s21 = ssub.s32 %s16, 1
    %s22 = ssub.s32 %s16, 2
    %s23 = sadd.s32 %s16, 1
    %s24 = ssub.s32 %s16, %s23
    %p25 = scmp.eq.s32.totalorder %s24, 0
    %s27 = sadd.s32 %s26, 1
    %s28 = scalar_select %p25, %s26, %s27
    %p31 = pneg %p25
    %p32 = scmp.eq.s32.totalorder %s16, 1
    %p33 = por %p31, %p32
    %p34 = scmp.ne.s32.totalorder %s26, %s29
    %p35 = scmp.eq.s32.totalorder %s16, 0
    %p36 = por %p34, %p35
    %p37 = scmp.ne.s32.totalorder %s26, %s29
    %p38 = scmp.eq.s32.totalorder %s21, 1
    %p39 = por %p37, %p38
    %p40 = scmp.ne.s32.totalorder %s29, %s30
    %p41 = scmp.eq.s32.totalorder %s21, 0
    %p42 = por %p40, %p41
    %p43 = scmp.ne.s32.totalorder %s29, %s30
    %p44 = scmp.eq.s32.totalorder %s22, 1
    %p45 = por %p43, %p44
    %p47 = scmp.ne.s32.totalorder %s30, %s46
    %p48 = scmp.eq.s32.totalorder %s22, 0
    %p49 = por %p47, %p48
    %s50 = ssub.s32 %s16, %s23
    %p51 = scmp.eq.s32.totalorder %s50, 0
    %s53 = sadd.s32 %s52, 1
    %s54 = scalar_select %p51, %s52, %s53
    %p57 = pneg %p51
    %p58 = scmp.eq.s32.totalorder %s16, 1
    %p59 = por %p57, %p58
    %p60 = scmp.ne.s32.totalorder %s52, %s55
    %p61 = scmp.eq.s32.totalorder %s16, 0
    %p62 = por %p60, %p61
    %p63 = scmp.ne.s32.totalorder %s52, %s55
    %p64 = scmp.eq.s32.totalorder %s21, 1
    %p65 = por %p63, %p64
    %p66 = scmp.ne.s32.totalorder %s55, %s56
    %p67 = scmp.eq.s32.totalorder %s21, 0
    %p68 = por %p66, %p67
    %p69 = scmp.ne.s32.totalorder %s55, %s56
    %p70 = scmp.eq.s32.totalorder %s22, 1
    %p71 = por %p69, %p70
    %p73 = scmp.ne.s32.totalorder %s56, %s72
    %p74 = scmp.eq.s32.totalorder %s22, 0
    %p75 = por %p73, %p74
    %s76 = ssub.s32 %s16, %s23
    %p77 = scmp.eq.s32.totalorder %s76, 0
    %s79 = sadd.s32 %s78, 1
    %s80 = scalar_select %p77, %s78, %s79
    %p83 = pneg %p77
    %p84 = scmp.eq.s32.totalorder %s16, 1
    %p85 = por %p83, %p84
    %p86 = scmp.ne.s32.totalorder %s78, %s81
    %p87 = scmp.eq.s32.totalorder %s16, 0
    %p88 = por %p86, %p87
    %p89 = scmp.ne.s32.totalorder %s78, %s81
    %p90 = scmp.eq.s32.totalorder %s21, 1
    %p91 = por %p89, %p90
    %p92 = scmp.ne.s32.totalorder %s81, %s82
    %p93 = scmp.eq.s32.totalorder %s21, 0
    %p94 = por %p92, %p93
    %p95 = scmp.ne.s32.totalorder %s81, %s82
    %p96 = scmp.eq.s32.totalorder %s22, 1
    %p97 = por %p95, %p96
    %p99 = scmp.ne.s32.totalorder %s82, %s98
    %p100 = scmp.eq.s32.totalorder %s22, 0
    %p101 = por %p99, %p100
    %s103 = sadd.s32 %s102, 1
    %p106 = scmp.eq.s32.totalorder %s16, 1
    %p107 = scmp.ne.s32.totalorder %s102, %s104
    %p108 = scmp.eq.s32.totalorder %s16, 0
    %p109 = por %p107, %p108
    %p110 = scmp.ne.s32.totalorder %s102, %s104
    %p111 = scmp.eq.s32.totalorder %s21, 1
    %p112 = por %p110, %p111
    %p113 = scmp.ne.s32.totalorder %s104, %s105
    %p114 = scmp.eq.s32.totalorder %s21, 0
    %p115 = por %p113, %p114
    %p116 = scmp.ne.s32.totalorder %s104, %s105
    %p117 = scmp.eq.s32.totalorder %s22, 1
    %p118 = por %p116, %p117
    %p120 = scmp.ne.s32.totalorder %s105, %s119
    %p121 = scmp.eq.s32.totalorder %s22, 0
    %p122 = por %p120, %p121
    %s124 = sadd.s32 %s123, 1
    %p127 = scmp.eq.s32.totalorder %s16, 1
    %p128 = scmp.ne.s32.totalorder %s123, %s125
    %p129 = scmp.eq.s32.totalorder %s16, 0
    %p130 = por %p128, %p129
    %p131 = scmp.ne.s32.totalorder %s123, %s125
    %p132 = scmp.eq.s32.totalorder %s21, 1
    %p133 = por %p131, %p132
    %p134 = scmp.ne.s32.totalorder %s125, %s126
    %p135 = scmp.eq.s32.totalorder %s21, 0
    %p136 = por %p134, %p135
    %p137 = scmp.ne.s32.totalorder %s125, %s126
    %p138 = scmp.eq.s32.totalorder %s22, 1
    %p139 = por %p137, %p138
    %p141 = scmp.ne.s32.totalorder %s126, %s140
    %p142 = scmp.eq.s32.totalorder %s22, 0
    %p143 = por %p141, %p142
    %s145 = sadd.s32 %s144, 1
    %p148 = scmp.eq.s32.totalorder %s16, 1
    %p149 = scmp.ne.s32.totalorder %s144, %s146
    %p150 = scmp.eq.s32.totalorder %s16, 0
    %p151 = por %p149, %p150
    %p152 = scmp.ne.s32.totalorder %s144, %s146
    %p153 = scmp.eq.s32.totalorder %s21, 1
    %p154 = por %p152, %p153
    %p155 = scmp.ne.s32.totalorder %s146, %s147
    %p156 = scmp.eq.s32.totalorder %s21, 0
    %p157 = por %p155, %p156
    %p158 = scmp.ne.s32.totalorder %s146, %s147
    %p159 = scmp.eq.s32.totalorder %s22, 1
    %p160 = por %p158, %p159
    %p162 = scmp.ne.s32.totalorder %s147, %s161
    %p163 = scmp.eq.s32.totalorder %s22, 0
    %p164 = por %p162, %p163
    %s166 = sadd.s32 %s165, 1
    %p169 = scmp.eq.s32.totalorder %s16, 1
    %p170 = scmp.ne.s32.totalorder %s165, %s167
    %p171 = scmp.eq.s32.totalorder %s16, 0
    %p172 = por %p170, %p171
    %p173 = scmp.ne.s32.totalorder %s165, %s167
    %p174 = scmp.eq.s32.totalorder %s21, 1
    %p175 = por %p173, %p174
    %p176 = scmp.ne.s32.totalorder %s167, %s168
    %p177 = scmp.eq.s32.totalorder %s21, 0
    %p178 = por %p176, %p177
    %p179 = scmp.ne.s32.totalorder %s167, %s168
    %p180 = scmp.eq.s32.totalorder %s22, 1
    %p181 = por %p179, %p180
    %p183 = scmp.ne.s32.totalorder %s168, %s182
    %p184 = scmp.eq.s32.totalorder %s22, 0
    %p185 = por %p183, %p184
    %s187 = sadd.s32 %s186, 1
    %p190 = scmp.eq.s32.totalorder %s16, 1
    %p191 = scmp.ne.s32.totalorder %s186, %s188
    %p192 = scmp.eq.s32.totalorder %s16, 0
    %p193 = por %p191, %p192
    %p194 = scmp.ne.s32.totalorder %s186, %s188
    %p195 = scmp.eq.s32.totalorder %s21, 1
    %p196 = por %p194, %p195
    %p197 = scmp.ne.s32.totalorder %s188, %s189
    %p198 = scmp.eq.s32.totalorder %s21, 0
    %p199 = por %p197, %p198
    %p200 = scmp.ne.s32.totalorder %s188, %s189
    %p201 = scmp.eq.s32.totalorder %s22, 1
    %p202 = por %p200, %p201
    %p204 = scmp.ne.s32.totalorder %s189, %s203
    %p205 = scmp.eq.s32.totalorder %s22, 0
    %p206 = por %p204, %p205
    %s208 = sadd.s32 %s207, 1
    %p211 = scmp.eq.s32.totalorder %s16, 1
    %p212 = scmp.ne.s32.totalorder %s207, %s209
    %p213 = scmp.eq.s32.totalorder %s16, 0
    %p214 = por %p212, %p213
    %p215 = scmp.ne.s32.totalorder %s207, %s209
    %p216 = scmp.eq.s32.totalorder %s21, 1
    %p217 = por %p215, %p216
    %p218 = scmp.ne.s32.totalorder %s209, %s210
    %p219 = scmp.eq.s32.totalorder %s21, 0
    %p220 = por %p218, %p219
    %p221 = scmp.ne.s32.totalorder %s209, %s210
    %p222 = scmp.eq.s32.totalorder %s22, 1
    %p223 = por %p221, %p222
    %p225 = scmp.ne.s32.totalorder %s210, %s224
    %p226 = scmp.eq.s32.totalorder %s22, 0
    %p227 = por %p225, %p226
    %s229 = sadd.s32 %s228, 1
    %p232 = scmp.eq.s32.totalorder %s16, 1
    %p233 = scmp.ne.s32.totalorder %s228, %s230
    %p234 = scmp.eq.s32.totalorder %s16, 0
    %p235 = por %p233, %p234
    %p236 = scmp.ne.s32.totalorder %s228, %s230
    %p237 = scmp.eq.s32.totalorder %s21, 1
    %p238 = por %p236, %p237
    %p239 = scmp.ne.s32.totalorder %s230, %s231
    %p240 = scmp.eq.s32.totalorder %s21, 0
    %p241 = por %p239, %p240
    %p242 = scmp.ne.s32.totalorder %s230, %s231
    %p243 = scmp.eq.s32.totalorder %s22, 1
    %p244 = por %p242, %p243
    %p246 = scmp.ne.s32.totalorder %s231, %s245
    %p247 = scmp.eq.s32.totalorder %s22, 0
    %p248 = por %p246, %p247
    %s249 = ssub.s32 %s16, %s23
    %p250 = scmp.eq.s32.totalorder %s249, 0
    %s252 = sadd.s32 %s251, 1
    %s253 = scalar_select %p250, %s251, %s252
    %p256 = pneg %p250
    %p257 = scmp.eq.s32.totalorder %s16, 1
    %p258 = por %p256, %p257
    %p259 = scmp.ne.s32.totalorder %s251, %s254
    %p260 = scmp.eq.s32.totalorder %s16, 0
    %p261 = por %p259, %p260
    %p262 = scmp.ne.s32.totalorder %s251, %s254
    %p263 = scmp.eq.s32.totalorder %s21, 1
    %p264 = por %p262, %p263
    %p265 = scmp.ne.s32.totalorder %s254, %s255
    %p266 = scmp.eq.s32.totalorder %s21, 0
    %p267 = por %p265, %p266
    %p268 = scmp.ne.s32.totalorder %s254, %s255
    %p269 = scmp.eq.s32.totalorder %s22, 1
    %p270 = por %p268, %p269
    %p272 = scmp.ne.s32.totalorder %s255, %s271
    %p273 = scmp.eq.s32.totalorder %s22, 0
    %p274 = por %p272, %p273
    %p275 = scmp.le.s32.totalorder 1, %s16
    %p276 = scmp.lt.s32.totalorder %s16, 3
    %p277 = pnand %p275, %p276
    %p278 = pneg %p277
    // Predicated region
    $region9: #{encoding_block.1} parent=5 // pred_check
      _
    $region10: #{encoding_block.1} parent=5 // pred_check_branch
      %280 = sbr.rel (%p277) target = $region12
    $region11: #{encoding_block.1} parent=5 // pred_region
      %s281 = ssub.s32 %s16, 1
      // Predicated region
      $region13: #{encoding_block.1} parent=11 // pred_check
        %p282 = pneg %p115
      $region14: #{encoding_block.1} parent=11 // pred_check_branch
        %284 = sbr.rel (%p282) target = $region16
      $region15: #{encoding_block.1} parent=11 // pred_region
        _
      $region16: #{encoding_block.1} parent=11 // pred_fallthru
        _
      // Predicated region
      $region17: #{encoding_block.1} parent=11 // pred_check
        %p285 = pneg %p136
      $region18: #{encoding_block.1} parent=11 // pred_check_branch
        %287 = sbr.rel (%p285) target = $region20
      $region19: #{encoding_block.1} parent=11 // pred_region
        _
      $region20: #{encoding_block.1} parent=11 // pred_fallthru
        _
      // Predicated region
      $region21: #{encoding_block.1} parent=11 // pred_check
        %p288 = pneg %p157
      $region22: #{encoding_block.1} parent=11 // pred_check_branch
        %290 = sbr.rel (%p288) target = $region24
      $region23: #{encoding_block.1} parent=11 // pred_region
        _
      $region24: #{encoding_block.1} parent=11 // pred_fallthru
        _
      // Predicated region
      $region25: #{encoding_block.1} parent=11 // pred_check
        %p291 = pneg %p178
      $region26: #{encoding_block.1} parent=11 // pred_check_branch
        %293 = sbr.rel (%p291) target = $region28
      $region27: #{encoding_block.1} parent=11 // pred_region
        _
      $region28: #{encoding_block.1} parent=11 // pred_fallthru
        _
      // Predicated region
      $region29: #{encoding_block.1} parent=11 // pred_check
        %p294 = pneg %p199
      $region30: #{encoding_block.1} parent=11 // pred_check_branch
        %296 = sbr.rel (%p294) target = $region32
      $region31: #{encoding_block.1} parent=11 // pred_region
        _
      $region32: #{encoding_block.1} parent=11 // pred_fallthru
        _
      // Predicated region
      $region33: #{encoding_block.1} parent=11 // pred_check
        %p297 = pneg %p220
      $region34: #{encoding_block.1} parent=11 // pred_check_branch
        %299 = sbr.rel (%p297) target = $region36
      $region35: #{encoding_block.1} parent=11 // pred_region
        _
      $region36: #{encoding_block.1} parent=11 // pred_fallthru
        _
      // Predicated region
      $region37: #{encoding_block.1} parent=11 // pred_check
        %p300 = pneg %p241
      $region38: #{encoding_block.1} parent=11 // pred_check_branch
        %302 = sbr.rel (%p300) target = $region40
      $region39: #{encoding_block.1} parent=11 // pred_region
        _
      $region40: #{encoding_block.1} parent=11 // pred_fallthru
        _
    $region12: #{encoding_block.1} parent=5 // pred_fallthru
      _
    %p303 = scmp.lt.s32.totalorder %s16, 2
    // Predicated region
    $region41: #{encoding_block.1} parent=5 // pred_check
      %p304 = pneg %p303
    $region42: #{encoding_block.1} parent=5 // pred_check_branch
      %306 = sbr.rel (%p304) target = $region44
    $region43: #{encoding_block.1} parent=5 // pred_region
      // Predicated region
      $region45: #{encoding_block.1} parent=43 // pred_check
        %p307 = pneg %p36
      $region46: #{encoding_block.1} parent=43 // pred_check_branch
        %309 = sbr.rel (%p307) target = $region48
      $region47: #{encoding_block.1} parent=43 // pred_region
        %p310 = scmp.lt.s32.totalorder %s16, 1
        %s311 = scalar_select %p310, %s16, 1
        %s312 = smul.addr %s311, 8
        %s313 = scalar_lea.vmem %s0, %s312
      $region48: #{encoding_block.1} parent=43 // pred_fallthru
        _
      // Predicated region
      $region49: #{encoding_block.1} parent=43 // pred_check
        %p314 = pneg %p62
      $region50: #{encoding_block.1} parent=43 // pred_check_branch
        %316 = sbr.rel (%p314) target = $region52
      $region51: #{encoding_block.1} parent=43 // pred_region
        %p317 = scmp.lt.s32.totalorder %s16, 1
        %s318 = scalar_select %p317, %s16, 1
        %s319 = smul.addr %s318, 8
        %s320 = scalar_lea.vmem %s1, %s319
      $region52: #{encoding_block.1} parent=43 // pred_fallthru
        _
      // Predicated region
      $region53: #{encoding_block.1} parent=43 // pred_check
        %p321 = pneg %p88
      $region54: #{encoding_block.1} parent=43 // pred_check_branch
        %323 = sbr.rel (%p321) target = $region56
      $region55: #{encoding_block.1} parent=43 // pred_region
        %p324 = scmp.lt.s32.totalorder %s16, 1
        %s325 = scalar_select %p324, %s16, 1
        %s326 = smul.addr %s325, 8
        %s327 = scalar_lea.vmem %s2, %s326
      $region56: #{encoding_block.1} parent=43 // pred_fallthru
        _
    $region44: #{encoding_block.1} parent=5 // pred_fallthru
      _
    %p328 = scmp.le.s32.totalorder 1, %s16
    %p329 = scmp.lt.s32.totalorder %s16, 3
    %p330 = pnand %p328, %p329
    %p331 = pneg %p330
    // Predicated region
    $region57: #{encoding_block.1} parent=5 // pred_check
      _
    $region58: #{encoding_block.1} parent=5 // pred_check_branch
      %333 = sbr.rel (%p330) target = $region60
    $region59: #{encoding_block.1} parent=5 // pred_region
      %s334 = ssub.s32 %s16, 1
      %p335 = scmp.lt.s32.totalorder %s21, 1
      %s336 = scalar_select %p335, %s21, 1
      %s337 = smul.addr %s336, 8
      %s338 = scalar_lea.vmem %s0, %s337
      %p339 = pneg %p42
      %p340 = pneg %p39
      %p341 = scmp.lt.s32.totalorder %s21, 1
      %s342 = scalar_select %p341, %s21, 1
      %s343 = smul.addr %s342, 8
      %s344 = scalar_lea.vmem %s1, %s343
      %p345 = pneg %p68
      %p346 = pneg %p65
      %p347 = scmp.lt.s32.totalorder %s21, 1
      %s348 = scalar_select %p347, %s21, 1
      %s349 = smul.addr %s348, 8
      %s350 = scalar_lea.vmem %s2, %s349
      %p351 = pneg %p94
      %p352 = pneg %p91
      %p353 = pneg %p115
      %p354 = pneg %p112
      %p355 = pneg %p136
      %p356 = pneg %p133
      %p357 = pneg %p157
      %p358 = pneg %p154
      %p359 = pneg %p178
      %p360 = pneg %p175
      %p361 = pneg %p199
      %p362 = pneg %p196
      %p363 = pneg %p220
      %p364 = pneg %p217
      %p365 = pneg %p241
      %p366 = pneg %p238
      %p367 = pneg %p267
      %p368 = pneg %p264
      %p369 = scmp.lt.s32.totalorder %s21, 1
      %s370 = scalar_select %p369, %s21, 1
      %s371 = smul.addr %s370, 8
      %s372 = scalar_lea.vmem %s10, %s371
      %p373 = scmp.lt.s32.totalorder %s21, 1
      %s374 = scalar_select %p373, %s21, 1
      %s375 = smul.addr %s374, 8
      %s376 = scalar_lea.vmem %s0, %s375
      %p377 = scmp.lt.s32.totalorder %s21, 1
      %s378 = scalar_select %p377, %s21, 1
      %s379 = smul.addr %s378, 8
      %s380 = scalar_lea.vmem %s1, %s379
      %p381 = scmp.lt.s32.totalorder %s21, 1
      %s382 = scalar_select %p381, %s21, 1
      %s383 = smul.addr %s382, 8
      %s384 = scalar_lea.vmem %s2, %s383
      %p385 = scmp.lt.s32.totalorder %s21, 1
      %s386 = scalar_select %p385, %s21, 1
      %s387 = smul.addr %s386, 8
      %s388 = scalar_lea.vmem %s10, %s387
      %v389 = vld [vmem:[%s376] sm:$0xff]
      %v390 = vld [vmem:[%s380] sm:$0xff]
      %v391 = vld [vmem:[%s384] sm:$0xff]
      %v392 = vld [vmem:[%s3] sm:$0xff]
      %v393 = vld [vmem:[%s3 + $0x8] sm:$0xff]
      %v394 = vld [vmem:[%s3 + $0x10] sm:$0xff]
      %v395 = vld [vmem:[%s3 + $0x18] sm:$0xff]
      %vm396 = vcmask 261120
      %v398 = vsel %vm396, %v389, 0
      %400 = vmatprep.subr.mxu0 0.0
      %401 = vmatpush1.msra.mxu0 %v392
      %402 = vmatprep.subr.mxu0 0.0
      %403 = vmatpush1.msra.mxu0 %v393
      %404 = vmatprep.subr.mxu0 0.0
      %405 = vmatpush1.msra.mxu0 %v394
      %406 = vmatprep.subr.mxu0 0.0
      %407 = vmatpush1.msra.mxu0 %v395
      %408 = vmatprep.subr.mxu0 0.0
      %409 = vmatpush1.msra.mxu0 0.0
      %410 = vmatprep.subr.mxu0 0.0
      %411 = vmatpush1.msra.mxu0 0.0
      %412 = vmatprep.subr.mxu0 0.0
      %413 = vmatpush1.msra.mxu0 0.0
      %414 = vmatprep.subr.mxu0 0.0
      %415 = vmatpush1.msra.mxu0 0.0
      %416 = vmatprep.subr.mxu0 0.0
      %417 = vmatpush1.msra.mxu0 0.0
      %418 = vmatprep.subr.mxu0 0.0
      %419 = vmatpush1.msra.mxu0 0.0
      %420 = vmatprep.subr.mxu0 0.0
      %421 = vmatpush1.msra.mxu0 0.0
      %422 = vmatprep.subr.mxu0 0.0
      %423 = vmatpush1.msra.mxu0 0.0
      %424 = vmatprep.subr.mxu0 0.0
      %425 = vmatpush1.msra.mxu0 0.0
      %426 = vmatprep.subr.mxu0 0.0
      %427 = vmatpush1.msra.mxu0 0.0
      %428 = vmatprep.subr.mxu0 0.0
      %429 = vmatpush1.msra.mxu0 0.0
      %430 = vmatprep.subr.mxu0 0.0
      %431 = vmatpush1.msra.mxu0 0.0
      %432 = vmatprep.subr.mxu0 0.0
      %433 = vmatpush1.msra.mxu0 0.0
      %434 = vmatprep.subr.mxu0 0.0
      %435 = vmatpush1.msra.mxu0 0.0
      %436 = vmatprep.subr.mxu0 0.0
      %437 = vmatpush1.msra.mxu0 0.0
      %438 = vmatprep.subr.mxu0 0.0
      %439 = vmatpush1.msra.mxu0 0.0
      %440 = vmatprep.subr.mxu0 0.0
      %441 = vmatpush1.msra.mxu0 0.0
      %442 = vmatprep.subr.mxu0 0.0
      %443 = vmatpush1.msra.mxu0 0.0
      %444 = vmatprep.subr.mxu0 0.0
      %445 = vmatpush1.msra.mxu0 0.0
      %446 = vmatprep.subr.mxu0 0.0
      %447 = vmatpush1.msra.mxu0 0.0
      %448 = vmatprep.subr.mxu0 0.0
      %449 = vmatpush1.msra.mxu0 0.0
      %450 = vmatprep.subr.mxu0 0.0
      %451 = vmatpush1.msra.mxu0 0.0
      %452 = vmatprep.subr.mxu0 0.0
      %453 = vmatpush1.msra.mxu0 0.0
      %454 = vmatprep.subr.mxu0 0.0
      %455 = vmatpush1.msra.mxu0 0.0
      %456 = vmatprep.subr.mxu0 0.0
      %457 = vmatpush1.msra.mxu0 0.0
      %458 = vmatprep.subr.mxu0 0.0
      %459 = vmatpush1.msra.mxu0 0.0
      %460 = vmatprep.subr.mxu0 0.0
      %461 = vmatpush1.msra.mxu0 0.0
      %462 = vmatprep.subr.mxu0 0.0
      %463 = vmatpush1.msra.mxu0 0.0
      %464 = vmatprep.mubr.f32.mxu0 0.0
      %465 = vmatmul.mubr.f32.gmra.mrb[0].mxu0 %v398
      %v466 = vpop.f32.mrb[0].mxu0
      %v467 = vadd.f32 0.0, %v466
      %v468 = vpop.f32.mrb[0].mxu0
      %469 = vdwg.mxu0
      %474 = vrot.lane.b32.xlu0 %v392, 96
      %v475 = vpop.permute.xlu0 %474
      %476 = vrot.lane.b32.xlu0 %v393, 96
      %v477 = vpop.permute.xlu0 %476
      %478 = vrot.lane.b32.xlu0 %v394, 96
      %v479 = vpop.permute.xlu0 %478
      %480 = vrot.lane.b32.xlu0 %v395, 96
      %v481 = vpop.permute.xlu0 %480
      %v487 = vsel %vm396, %v390, 0
      %489 = vmatprep.subr.mxu0 0.0
      %490 = vmatpush1.msra.mxu0 %v475
      %491 = vmatprep.subr.mxu0 0.0
      %492 = vmatpush1.msra.mxu0 %v477
      %493 = vmatprep.subr.mxu0 0.0
      %494 = vmatpush1.msra.mxu0 %v479
      %495 = vmatprep.subr.mxu0 0.0
      %496 = vmatpush1.msra.mxu0 %v481
      %497 = vmatprep.subr.mxu0 0.0
      %498 = vmatpush1.msra.mxu0 0.0
      %499 = vmatprep.subr.mxu0 0.0
      %500 = vmatpush1.msra.mxu0 0.0
      %501 = vmatprep.subr.mxu0 0.0
      %502 = vmatpush1.msra.mxu0 0.0
      %503 = vmatprep.subr.mxu0 0.0
      %504 = vmatpush1.msra.mxu0 0.0
      %505 = vmatprep.subr.mxu0 0.0
      %506 = vmatpush1.msra.mxu0 0.0
      %507 = vmatprep.subr.mxu0 0.0
      %508 = vmatpush1.msra.mxu0 0.0
      %509 = vmatprep.subr.mxu0 0.0
      %510 = vmatpush1.msra.mxu0 0.0
      %511 = vmatprep.subr.mxu0 0.0
      %512 = vmatpush1.msra.mxu0 0.0
      %513 = vmatprep.subr.mxu0 0.0
      %514 = vmatpush1.msra.mxu0 0.0
      %515 = vmatprep.subr.mxu0 0.0
      %516 = vmatpush1.msra.mxu0 0.0
      %517 = vmatprep.subr.mxu0 0.0
      %518 = vmatpush1.msra.mxu0 0.0
      %519 = vmatprep.subr.mxu0 0.0
      %520 = vmatpush1.msra.mxu0 0.0
      %521 = vmatprep.subr.mxu0 0.0
      %522 = vmatpush1.msra.mxu0 0.0
      %523 = vmatprep.subr.mxu0 0.0
      %524 = vmatpush1.msra.mxu0 0.0
      %525 = vmatprep.subr.mxu0 0.0
      %526 = vmatpush1.msra.mxu0 0.0
      %527 = vmatprep.subr.mxu0 0.0
      %528 = vmatpush1.msra.mxu0 0.0
      %529 = vmatprep.subr.mxu0 0.0
      %530 = vmatpush1.msra.mxu0 0.0
      %531 = vmatprep.subr.mxu0 0.0
      %532 = vmatpush1.msra.mxu0 0.0
      %533 = vmatprep.subr.mxu0 0.0
      %534 = vmatpush1.msra.mxu0 0.0
      %535 = vmatprep.subr.mxu0 0.0
      %536 = vmatpush1.msra.mxu0 0.0
      %537 = vmatprep.subr.mxu0 0.0
      %538 = vmatpush1.msra.mxu0 0.0
      %539 = vmatprep.subr.mxu0 0.0
      %540 = vmatpush1.msra.mxu0 0.0
      %541 = vmatprep.subr.mxu0 0.0
      %542 = vmatpush1.msra.mxu0 0.0
      %543 = vmatprep.subr.mxu0 0.0
      %544 = vmatpush1.msra.mxu0 0.0
      %545 = vmatprep.subr.mxu0 0.0
      %546 = vmatpush1.msra.mxu0 0.0
      %547 = vmatprep.subr.mxu0 0.0
      %548 = vmatpush1.msra.mxu0 0.0
      %549 = vmatprep.subr.mxu0 0.0
      %550 = vmatpush1.msra.mxu0 0.0
      %551 = vmatprep.subr.mxu0 0.0
      %552 = vmatpush1.msra.mxu0 0.0
      %553 = vmatprep.mubr.f32.mxu0 0.0
      %554 = vmatmul.mubr.f32.gmra.mrb[0].mxu0 %v487
      %v555 = vpop.f32.mrb[0].mxu0
      %v556 = vadd.f32 0.0, %v555
      %v557 = vpop.f32.mrb[0].mxu0
      %558 = vdwg.mxu0
      %559 = vrot.lane.b32.xlu0 %v392, 64
      %v560 = vpop.permute.xlu0 %559
      %561 = vrot.lane.b32.xlu0 %v393, 64
      %v562 = vpop.permute.xlu0 %561
      %563 = vrot.lane.b32.xlu0 %v394, 64
      %v564 = vpop.permute.xlu0 %563
      %565 = vrot.lane.b32.xlu0 %v395, 64
      %v566 = vpop.permute.xlu0 %565
      %571 = vmatprep.subr.mxu0 0.0
      %572 = vmatpush1.msra.mxu0 %v560
      %573 = vmatprep.subr.mxu0 0.0
      %574 = vmatpush1.msra.mxu0 %v562
      %575 = vmatprep.subr.mxu0 0.0
      %576 = vmatpush1.msra.mxu0 %v564
      %577 = vmatprep.subr.mxu0 0.0
      %578 = vmatpush1.msra.mxu0 %v566
      %579 = vmatprep.subr.mxu0 0.0
      %580 = vmatpush1.msra.mxu0 0.0
      %581 = vmatprep.subr.mxu0 0.0
      %582 = vmatpush1.msra.mxu0 0.0
      %583 = vmatprep.subr.mxu0 0.0
      %584 = vmatpush1.msra.mxu0 0.0
      %585 = vmatprep.subr.mxu0 0.0
      %586 = vmatpush1.msra.mxu0 0.0
      %587 = vmatprep.subr.mxu0 0.0
      %588 = vmatpush1.msra.mxu0 0.0
      %589 = vmatprep.subr.mxu0 0.0
      %590 = vmatpush1.msra.mxu0 0.0
      %591 = vmatprep.subr.mxu0 0.0
      %592 = vmatpush1.msra.mxu0 0.0
      %593 = vmatprep.subr.mxu0 0.0
      %594 = vmatpush1.msra.mxu0 0.0
      %595 = vmatprep.subr.mxu0 0.0
      %596 = vmatpush1.msra.mxu0 0.0
      %597 = vmatprep.subr.mxu0 0.0
      %598 = vmatpush1.msra.mxu0 0.0
      %599 = vmatprep.subr.mxu0 0.0
      %600 = vmatpush1.msra.mxu0 0.0
      %601 = vmatprep.subr.mxu0 0.0
      %602 = vmatpush1.msra.mxu0 0.0
      %603 = vmatprep.subr.mxu0 0.0
      %604 = vmatpush1.msra.mxu0 0.0
      %605 = vmatprep.subr.mxu0 0.0
      %606 = vmatpush1.msra.mxu0 0.0
      %607 = vmatprep.subr.mxu0 0.0
      %608 = vmatpush1.msra.mxu0 0.0
      %609 = vmatprep.subr.mxu0 0.0
      %610 = vmatpush1.msra.mxu0 0.0
      %611 = vmatprep.subr.mxu0 0.0
      %612 = vmatpush1.msra.mxu0 0.0
      %613 = vmatprep.subr.mxu0 0.0
      %614 = vmatpush1.msra.mxu0 0.0
      %615 = vmatprep.subr.mxu0 0.0
      %616 = vmatpush1.msra.mxu0 0.0
      %617 = vmatprep.subr.mxu0 0.0
      %618 = vmatpush1.msra.mxu0 0.0
      %619 = vmatprep.subr.mxu0 0.0
      %620 = vmatpush1.msra.mxu0 0.0
      %621 = vmatprep.subr.mxu0 0.0
      %622 = vmatpush1.msra.mxu0 0.0
      %623 = vmatprep.subr.mxu0 0.0
      %624 = vmatpush1.msra.mxu0 0.0
      %625 = vmatprep.subr.mxu0 0.0
      %626 = vmatpush1.msra.mxu0 0.0
      %627 = vmatprep.subr.mxu0 0.0
      %628 = vmatpush1.msra.mxu0 0.0
      %629 = vmatprep.subr.mxu0 0.0
      %630 = vmatpush1.msra.mxu0 0.0
      %631 = vmatprep.subr.mxu0 0.0
      %632 = vmatpush1.msra.mxu0 0.0
      %633 = vmatprep.subr.mxu0 0.0
      %634 = vmatpush1.msra.mxu0 0.0
      %635 = vmatprep.mubr.f32.mxu0 0.0
      %636 = vmatmul.mubr.f32.gmra.mrb[0].mxu0 %v487
      %v637 = vpop.f32.mrb[0].mxu0
      %v638 = vadd.f32 0.0, %v637
      %v639 = vpop.f32.mrb[0].mxu0
      %640 = vdwg.mxu0
      %v641 = vld [vmem:[%s9] sm:$0xff]
      %v642 = vld [vmem:[%s9 + $0x8] sm:$0xff]
      %v643 = vld [vmem:[%s9 + $0x10] sm:$0xff]
      %v644 = vld [vmem:[%s9 + $0x18] sm:$0xff]
      %v645 = vmul.f32 %v556, %v641
      %v646 = vmul.f32 %v556, %v642
      %v647 = vmul.f32 %v556, %v643
      %v648 = vmul.f32 %v556, %v644
      %v649 = vmul.f32 %v638, %v641
      %v650 = vmul.f32 %v638, %v642
      %v651 = vmul.f32 %v638, %v643
      %v652 = vmul.f32 %v638, %v644
      %v654 = vsel %vm396, %v467, 0
      %v657 = vsel %vm396, %v645, 0
      %v660 = vsel %vm396, %v646, 0
      %v663 = vsel %vm396, %v647, 0
      %v666 = vsel %vm396, %v648, 0
      %668 = vmatprep.subr.mxu0 0.0
      %669 = vmatpush1.xpose.msra.mxu0 %v657
      %670 = vmatprep.subr.mxu0 0.0
      %671 = vmatpush1.xpose.msra.mxu0 %v660
      %672 = vmatprep.subr.mxu0 0.0
      %673 = vmatpush1.xpose.msra.mxu0 %v663
      %674 = vmatprep.subr.mxu0 0.0
      %675 = vmatpush1.xpose.msra.mxu0 %v666
      %676 = vmatprep.subr.mxu0 0.0
      %677 = vmatpush1.xpose.msra.mxu0 0.0
      %678 = vmatprep.subr.mxu0 0.0
      %679 = vmatpush1.xpose.msra.mxu0 0.0
      %680 = vmatprep.subr.mxu0 0.0
      %681 = vmatpush1.xpose.msra.mxu0 0.0
      %682 = vmatprep.subr.mxu0 0.0
      %683 = vmatpush1.xpose.msra.mxu0 0.0
      %684 = vmatprep.subr.mxu0 0.0
      %685 = vmatpush1.xpose.msra.mxu0 0.0
      %686 = vmatprep.subr.mxu0 0.0
      %687 = vmatpush1.xpose.msra.mxu0 0.0
      %688 = vmatprep.subr.mxu0 0.0
      %689 = vmatpush1.xpose.msra.mxu0 0.0
      %690 = vmatprep.subr.mxu0 0.0
      %691 = vmatpush1.xpose.msra.mxu0 0.0
      %692 = vmatprep.subr.mxu0 0.0
      %693 = vmatpush1.xpose.msra.mxu0 0.0
      %694 = vmatprep.subr.mxu0 0.0
      %695 = vmatpush1.xpose.msra.mxu0 0.0
      %696 = vmatprep.subr.mxu0 0.0
      %697 = vmatpush1.xpose.msra.mxu0 0.0
      %698 = vmatprep.subr.mxu0 0.0
      %699 = vmatpush1.xpose.msra.mxu0 0.0
      %700 = vmatprep.subr.mxu0 0.0
      %701 = vmatpush1.xpose.msra.mxu0 0.0
      %702 = vmatprep.subr.mxu0 0.0
      %703 = vmatpush1.xpose.msra.mxu0 0.0
      %704 = vmatprep.subr.mxu0 0.0
      %705 = vmatpush1.xpose.msra.mxu0 0.0
      %706 = vmatprep.subr.mxu0 0.0
      %707 = vmatpush1.xpose.msra.mxu0 0.0
      %708 = vmatprep.subr.mxu0 0.0
      %709 = vmatpush1.xpose.msra.mxu0 0.0
      %710 = vmatprep.subr.mxu0 0.0
      %711 = vmatpush1.xpose.msra.mxu0 0.0
      %712 = vmatprep.subr.mxu0 0.0
      %713 = vmatpush1.xpose.msra.mxu0 0.0
      %714 = vmatprep.subr.mxu0 0.0
      %715 = vmatpush1.xpose.msra.mxu0 0.0
      %716 = vmatprep.subr.mxu0 0.0
      %717 = vmatpush1.xpose.msra.mxu0 0.0
      %718 = vmatprep.subr.mxu0 0.0
      %719 = vmatpush1.xpose.msra.mxu0 0.0
      %720 = vmatprep.subr.mxu0 0.0
      %721 = vmatpush1.xpose.msra.mxu0 0.0
      %722 = vmatprep.subr.mxu0 0.0
      %723 = vmatpush1.xpose.msra.mxu0 0.0
      %724 = vmatprep.subr.mxu0 0.0
      %725 = vmatpush1.xpose.msra.mxu0 0.0
      %726 = vmatprep.subr.mxu0 0.0
      %727 = vmatpush1.xpose.msra.mxu0 0.0
      %728 = vmatprep.subr.mxu0 0.0
      %729 = vmatpush1.xpose.msra.mxu0 0.0
      %730 = vmatprep.subr.mxu0 0.0
      %731 = vmatpush1.xpose.msra.mxu0 0.0
      %732 = vmatprep.mubr.f32.mxu0 0.0
      %733 = vmatmul.mubr.f32.gmra.mrb[0].mxu0 %v654
      %v734 = vpop.f32.mrb[0].mxu0
      %v735 = vadd.f32 0.0, %v734
      %v736 = vpop.f32.mrb[0].mxu0
      %737 = vdwg.mxu0
      %739 = vrot.lane.b32.xlu0 %v391, 32
      %v740 = vpop.permute.xlu0 %739
      %v742 = vsel %vm396, %v735, %v740
      %v743 = vld [vmem:[%s4] sm:$0xff]
      %v744 = vld [vmem:[%s4 + $0x8] sm:$0xff]
      %v745 = vld [vmem:[%s4 + $0x10] sm:$0xff]
      %v746 = vld [vmem:[%s4 + $0x18] sm:$0xff]
      %v747 = vld [vmem:[%s4 + $0x20] sm:$0xff]
      %v748 = vld [vmem:[%s4 + $0x28] sm:$0xff]
      %v749 = vld [vmem:[%s4 + $0x30] sm:$0xff]
      %v750 = vld [vmem:[%s4 + $0x38] sm:$0xff]
      %v751 = vld [vmem:[%s4 + $0x40] sm:$0xff]
      %v752 = vld [vmem:[%s4 + $0x48] sm:$0xff]
      %v753 = vld [vmem:[%s4 + $0x50] sm:$0xff]
      %v754 = vld [vmem:[%s4 + $0x58] sm:$0xff]
      %v755 = vld [vmem:[%s4 + $0x60] sm:$0xff]
      %v756 = vld [vmem:[%s4 + $0x68] sm:$0xff]
      %v757 = vld [vmem:[%s4 + $0x70] sm:$0xff]
      %v758 = vld [vmem:[%s4 + $0x78] sm:$0xff]
      %v759 = vld [vmem:[%s4 + $0x80] sm:$0xff]
      %v760 = vld [vmem:[%s4 + $0x88] sm:$0xff]
      %v761 = vld [vmem:[%s4 + $0x90] sm:$0xff]
      %v762 = vld [vmem:[%s4 + $0x98] sm:$0xff]
      %s763 = scalar_lea.vmem %s4, 160
      %v764 = vld [vmem:[%s763] ss:$8 sm:$0xf]
      %v766 = vlaneseq
      %v767 = vshrl.u32 %v766, 7
      %v768 = vsub.s32 0, %v767
      %v769 = vrot.slane %v764, %v768
      %v770 = vlaneseq
      %v771 = vshrl.u32 %v770, 7
      %v772 = vsub.s32 1, %v771
      %v773 = vrot.slane %v764, %v772
      %v774 = vlaneseq
      %v775 = vshrl.u32 %v774, 7
      %v776 = vsub.s32 2, %v775
      %v777 = vrot.slane %v764, %v776
      %v778 = vlaneseq
      %v779 = vshrl.u32 %v778, 7
      %v780 = vsub.s32 3, %v779
      %v781 = vrot.slane %v764, %v780
      %vm786 = vcmask 326656
      %v788 = vsel %vm786, %v742, 0
      %790 = vmatprep.subr.mxu0 %v744
      %791 = vmatpush1.msra.mxu0 %v743
      %792 = vmatprep.subr.mxu0 %v748
      %793 = vmatpush1.msra.mxu0 %v747
      %794 = vmatprep.subr.mxu0 %v752
      %795 = vmatpush1.msra.mxu0 %v751
      %796 = vmatprep.subr.mxu0 %v756
      %797 = vmatpush1.msra.mxu0 %v755
      %798 = vmatprep.subr.mxu0 %v760
      %799 = vmatpush1.msra.mxu0 %v759
      %800 = vmatprep.subr.mxu0 0.0
      %801 = vmatpush1.msra.mxu0 0.0
      %802 = vmatprep.subr.mxu0 0.0
      %803 = vmatpush1.msra.mxu0 0.0
      %804 = vmatprep.subr.mxu0 0.0
      %805 = vmatpush1.msra.mxu0 0.0
      %806 = vmatprep.subr.mxu0 0.0
      %807 = vmatpush1.msra.mxu0 0.0
      %808 = vmatprep.subr.mxu0 0.0
      %809 = vmatpush1.msra.mxu0 0.0
      %810 = vmatprep.subr.mxu0 0.0
      %811 = vmatpush1.msra.mxu0 0.0
      %812 = vmatprep.subr.mxu0 0.0
      %813 = vmatpush1.msra.mxu0 0.0
      %814 = vmatprep.subr.mxu0 0.0
      %815 = vmatpush1.msra.mxu0 0.0
      %816 = vmatprep.subr.mxu0 0.0
      %817 = vmatpush1.msra.mxu0 0.0
      %818 = vmatprep.subr.mxu0 0.0
      %819 = vmatpush1.msra.mxu0 0.0
      %820 = vmatprep.subr.mxu0 0.0
      %821 = vmatpush1.msra.mxu0 0.0
      %822 = vmatprep.subr.mxu0 0.0
      %823 = vmatpush1.msra.mxu0 0.0
      %824 = vmatprep.subr.mxu0 0.0
      %825 = vmatpush1.msra.mxu0 0.0
      %826 = vmatprep.subr.mxu0 0.0
      %827 = vmatpush1.msra.mxu0 0.0
      %828 = vmatprep.subr.mxu0 0.0
      %829 = vmatpush1.msra.mxu0 0.0
      %830 = vmatprep.subr.mxu0 0.0
      %831 = vmatpush1.msra.mxu0 0.0
      %832 = vmatprep.subr.mxu0 0.0
      %833 = vmatpush1.msra.mxu0 0.0
      %834 = vmatprep.subr.mxu0 0.0
      %835 = vmatpush1.msra.mxu0 0.0
      %836 = vmatprep.subr.mxu0 0.0
      %837 = vmatpush1.msra.mxu0 0.0
      %838 = vmatprep.subr.mxu0 0.0
      %839 = vmatpush1.msra.mxu0 0.0
      %840 = vmatprep.subr.mxu0 0.0
      %841 = vmatpush1.msra.mxu0 0.0
      %842 = vmatprep.subr.mxu0 0.0
      %843 = vmatpush1.msra.mxu0 0.0
      %844 = vmatprep.subr.mxu0 0.0
      %845 = vmatpush1.msra.mxu0 0.0
      %846 = vmatprep.subr.mxu0 0.0
      %847 = vmatpush1.msra.mxu0 0.0
      %848 = vmatprep.subr.mxu0 0.0
      %849 = vmatpush1.msra.mxu0 0.0
      %850 = vmatprep.subr.mxu0 0.0
      %851 = vmatpush1.msra.mxu0 0.0
      %852 = vmatprep.subr.mxu0 0.0
      %853 = vmatpush1.msra.mxu0 0.0
      %854 = vmatprep.mubr.f32.mxu0 0.0
      %855 = vmatmul.mubr.f32.gmra.mrb[0].mxu0 %v788
      %v856 = vpop.f32.mrb[0].mxu0
      %v857 = vadd.f32 %v769, %v856
      %v858 = vpop.f32.mrb[0].mxu0
      %v859 = vadd.f32 %v773, %v858
      %860 = vdwg.mxu0
      %861 = vmatprep.subr.mxu0 %v746
      %862 = vmatpush1.msra.mxu0 %v745
      %863 = vmatprep.subr.mxu0 %v750
      %864 = vmatpush1.msra.mxu0 %v749
      %865 = vmatprep.subr.mxu0 %v754
      %866 = vmatpush1.msra.mxu0 %v753
      %867 = vmatprep.subr.mxu0 %v758
      %868 = vmatpush1.msra.mxu0 %v757
      %869 = vmatprep.subr.mxu0 %v762
      %870 = vmatpush1.msra.mxu0 %v761
      %871 = vmatprep.subr.mxu0 0.0
      %872 = vmatpush1.msra.mxu0 0.0
      %873 = vmatprep.subr.mxu0 0.0
      %874 = vmatpush1.msra.mxu0 0.0
      %875 = vmatprep.subr.mxu0 0.0
      %876 = vmatpush1.msra.mxu0 0.0
      %877 = vmatprep.subr.mxu0 0.0
      %878 = vmatpush1.msra.mxu0 0.0
      %879 = vmatprep.subr.mxu0 0.0
      %880 = vmatpush1.msra.mxu0 0.0
      %881 = vmatprep.subr.mxu0 0.0
      %882 = vmatpush1.msra.mxu0 0.0
      %883 = vmatprep.subr.mxu0 0.0
      %884 = vmatpush1.msra.mxu0 0.0
      %885 = vmatprep.subr.mxu0 0.0
      %886 = vmatpush1.msra.mxu0 0.0
      %887 = vmatprep.subr.mxu0 0.0
      %888 = vmatpush1.msra.mxu0 0.0
      %889 = vmatprep.subr.mxu0 0.0
      %890 = vmatpush1.msra.mxu0 0.0
      %891 = vmatprep.subr.mxu0 0.0
      %892 = vmatpush1.msra.mxu0 0.0
      %893 = vmatprep.subr.mxu0 0.0
      %894 = vmatpush1.msra.mxu0 0.0
      %895 = vmatprep.subr.mxu0 0.0
      %896 = vmatpush1.msra.mxu0 0.0
      %897 = vmatprep.subr.mxu0 0.0
      %898 = vmatpush1.msra.mxu0 0.0
      %899 = vmatprep.subr.mxu0 0.0
      %900 = vmatpush1.msra.mxu0 0.0
      %901 = vmatprep.subr.mxu0 0.0
      %902 = vmatpush1.msra.mxu0 0.0
      %903 = vmatprep.subr.mxu0 0.0
      %904 = vmatpush1.msra.mxu0 0.0
      %905 = vmatprep.subr.mxu0 0.0
      %906 = vmatpush1.msra.mxu0 0.0
      %907 = vmatprep.subr.mxu0 0.0
      %908 = vmatpush1.msra.mxu0 0.0
      %909 = vmatprep.subr.mxu0 0.0
      %910 = vmatpush1.msra.mxu0 0.0
      %911 = vmatprep.subr.mxu0 0.0
      %912 = vmatpush1.msra.mxu0 0.0
      %913 = vmatprep.subr.mxu0 0.0
      %914 = vmatpush1.msra.mxu0 0.0
      %915 = vmatprep.subr.mxu0 0.0
      %916 = vmatpush1.msra.mxu0 0.0
      %917 = vmatprep.subr.mxu0 0.0
      %918 = vmatpush1.msra.mxu0 0.0
      %919 = vmatprep.subr.mxu0 0.0
      %920 = vmatpush1.msra.mxu0 0.0
      %921 = vmatprep.subr.mxu0 0.0
      %922 = vmatpush1.msra.mxu0 0.0
      %923 = vmatprep.subr.mxu0 0.0
      %924 = vmatpush1.msra.mxu0 0.0
      %925 = vmatprep.mubr.f32.mxu0 0.0
      %926 = vmatmul.mubr.f32.gmra.mrb[0].mxu0 %v788
      %v927 = vpop.f32.mrb[0].mxu0
      %v928 = vadd.f32 %v777, %v927
      %v929 = vpop.f32.mrb[0].mxu0
      %v930 = vadd.f32 %v781, %v929
      %931 = vdwg.mxu0
      %v932 = vmax.f32 %v857, 0.0
      %v933 = vmax.f32 %v859, 0.0
      %v934 = vmax.f32 %v928, 0.0
      %v935 = vmax.f32 %v930, 0.0
      %v936 = vld [vmem:[%s5] sm:$0xff]
      %v937 = vld [vmem:[%s5 + $0x8] sm:$0xff]
      %v938 = vld [vmem:[%s5 + $0x10] sm:$0xff]
      %v939 = vld [vmem:[%s5 + $0x18] sm:$0xff]
      %v940 = vld [vmem:[%s5 + $0x20] sm:$0xff]
      %v941 = vld [vmem:[%s5 + $0x28] sm:$0xff]
      %v942 = vld [vmem:[%s5 + $0x30] sm:$0xff]
      %v943 = vld [vmem:[%s5 + $0x38] sm:$0xff]
      %v944 = vld [vmem:[%s5 + $0x40] sm:$0xff]
      %v945 = vld [vmem:[%s5 + $0x48] sm:$0xff]
      %v946 = vld [vmem:[%s5 + $0x50] sm:$0xff]
      %v947 = vld [vmem:[%s5 + $0x58] sm:$0xff]
      %v948 = vld [vmem:[%s5 + $0x60] sm:$0xff]
      %v949 = vld [vmem:[%s5 + $0x68] sm:$0xff]
      %v950 = vld [vmem:[%s5 + $0x70] sm:$0xff]
      %v951 = vld [vmem:[%s5 + $0x78] sm:$0xff]
      %v952 = vld [vmem:[%s5 + $0x80] sm:$0xff]
      %v953 = vld [vmem:[%s5 + $0x88] sm:$0xff]
      %v954 = vld [vmem:[%s5 + $0x90] sm:$0xff]
      %v955 = vld [vmem:[%s5 + $0x98] sm:$0xff]
      %v956 = vld [vmem:[%s5 + $0xa0] sm:$0xff]
      %v957 = vld [vmem:[%s5 + $0xa8] sm:$0xff]
      %v958 = vld [vmem:[%s5 + $0xb0] sm:$0xff]
      %v959 = vld [vmem:[%s5 + $0xb8] sm:$0xff]
      %v960 = vld [vmem:[%s5 + $0xc0] sm:$0xff]
      %v961 = vld [vmem:[%s5 + $0xc8] sm:$0xff]
      %v962 = vld [vmem:[%s5 + $0xd0] sm:$0xff]
      %v963 = vld [vmem:[%s5 + $0xd8] sm:$0xff]
      %v964 = vld [vmem:[%s5 + $0xe0] sm:$0xff]
      %v965 = vld [vmem:[%s5 + $0xe8] sm:$0xff]
      %v966 = vld [vmem:[%s5 + $0xf0] sm:$0xff]
      %v967 = vld [vmem:[%s5 + $0xf8] sm:$0xff]
      %v968 = vld [vmem:[%s5 + $0x100] sm:$0xff]
      %v969 = vld [vmem:[%s5 + $0x108] sm:$0xff]
      %v970 = vld [vmem:[%s5 + $0x110] sm:$0xff]
      %v971 = vld [vmem:[%s5 + $0x118] sm:$0xff]
      %v972 = vld [vmem:[%s5 + $0x120] sm:$0xff]
      %v973 = vld [vmem:[%s5 + $0x128] sm:$0xff]
      %v974 = vld [vmem:[%s5 + $0x130] sm:$0xff]
      %v975 = vld [vmem:[%s5 + $0x138] sm:$0xff]
      %v976 = vld [vmem:[%s5 + $0x140] sm:$0xff]
      %v977 = vld [vmem:[%s5 + $0x148] sm:$0xff]
      %v978 = vld [vmem:[%s5 + $0x150] sm:$0xff]
      %v979 = vld [vmem:[%s5 + $0x158] sm:$0xff]
      %v980 = vld [vmem:[%s5 + $0x160] sm:$0xff]
      %v981 = vld [vmem:[%s5 + $0x168] sm:$0xff]
      %v982 = vld [vmem:[%s5 + $0x170] sm:$0xff]
      %v983 = vld [vmem:[%s5 + $0x178] sm:$0xff]
      %v984 = vld [vmem:[%s5 + $0x180] sm:$0xff]
      %v985 = vld [vmem:[%s5 + $0x188] sm:$0xff]
      %v986 = vld [vmem:[%s5 + $0x190] sm:$0xff]
      %v987 = vld [vmem:[%s5 + $0x198] sm:$0xff]
      %v988 = vld [vmem:[%s5 + $0x1a0] sm:$0xff]
      %v989 = vld [vmem:[%s5 + $0x1a8] sm:$0xff]
      %v990 = vld [vmem:[%s5 + $0x1b0] sm:$0xff]
      %v991 = vld [vmem:[%s5 + $0x1b8] sm:$0xff]
      %v992 = vld [vmem:[%s5 + $0x1c0] sm:$0xff]
      %v993 = vld [vmem:[%s5 + $0x1c8] sm:$0xff]
      %v994 = vld [vmem:[%s5 + $0x1d0] sm:$0xff]
      %v995 = vld [vmem:[%s5 + $0x1d8] sm:$0xff]
      %v996 = vld [vmem:[%s5 + $0x1e0] sm:$0xff]
      %v997 = vld [vmem:[%s5 + $0x1e8] sm:$0xff]
      %v998 = vld [vmem:[%s5 + $0x1f0] sm:$0xff]
      %v999 = vld [vmem:[%s5 + $0x1f8] sm:$0xff]
      %v1000 = vld [vmem:[%s5 + $0x200] sm:$0x1]
      %v1001 = vlaneseq
      %v1002 = vshrl.u32 %v1001, 7
      %v1003 = vsub.s32 0, %v1002
      %v1004 = vrot.slane %v1000, %v1003
      %1005 = vmatprep.subr.mxu0 0.0
      %1006 = vmatpush1.msra.mxu0 %v936
      %1007 = vmatprep.subr.mxu0 0.0
      %1008 = vmatpush1.msra.mxu0 %v937
      %1009 = vmatprep.subr.mxu0 0.0
      %1010 = vmatpush1.msra.mxu0 %v938
      %1011 = vmatprep.subr.mxu0 0.0
      %1012 = vmatpush1.msra.mxu0 %v939
      %1013 = vmatprep.subr.mxu0 0.0
      %1014 = vmatpush1.msra.mxu0 %v940
      %1015 = vmatprep.subr.mxu0 0.0
      %1016 = vmatpush1.msra.mxu0 %v941
      %1017 = vmatprep.subr.mxu0 0.0
      %1018 = vmatpush1.msra.mxu0 %v942
      %1019 = vmatprep.subr.mxu0 0.0
      %1020 = vmatpush1.msra.mxu0 %v943
      %1021 = vmatprep.subr.mxu0 0.0
      %1022 = vmatpush1.msra.mxu0 %v944
      %1023 = vmatprep.subr.mxu0 0.0
      %1024 = vmatpush1.msra.mxu0 %v945
      %1025 = vmatprep.subr.mxu0 0.0
      %1026 = vmatpush1.msra.mxu0 %v946
      %1027 = vmatprep.subr.mxu0 0.0
      %1028 = vmatpush1.msra.mxu0 %v947
      %1029 = vmatprep.subr.mxu0 0.0
      %1030 = vmatpush1.msra.mxu0 %v948
      %1031 = vmatprep.subr.mxu0 0.0
      %1032 = vmatpush1.msra.mxu0 %v949
      %1033 = vmatprep.subr.mxu0 0.0
      %1034 = vmatpush1.msra.mxu0 %v950
      %1035 = vmatprep.subr.mxu0 0.0
      %1036 = vmatpush1.msra.mxu0 %v951
      %1037 = vmatprep.subr.mxu0 0.0
      %1038 = vmatpush1.msra.mxu0 %v952
      %1039 = vmatprep.subr.mxu0 0.0
      %1040 = vmatpush1.msra.mxu0 %v953
      %1041 = vmatprep.subr.mxu0 0.0
      %1042 = vmatpush1.msra.mxu0 %v954
      %1043 = vmatprep.subr.mxu0 0.0
      %1044 = vmatpush1.msra.mxu0 %v955
      %1045 = vmatprep.subr.mxu0 0.0
      %1046 = vmatpush1.msra.mxu0 %v956
      %1047 = vmatprep.subr.mxu0 0.0
      %1048 = vmatpush1.msra.mxu0 %v957
      %1049 = vmatprep.subr.mxu0 0.0
      %1050 = vmatpush1.msra.mxu0 %v958
      %1051 = vmatprep.subr.mxu0 0.0
      %1052 = vmatpush1.msra.mxu0 %v959
      %1053 = vmatprep.subr.mxu0 0.0
      %1054 = vmatpush1.msra.mxu0 %v960
      %1055 = vmatprep.subr.mxu0 0.0
      %1056 = vmatpush1.msra.mxu0 %v961
      %1057 = vmatprep.subr.mxu0 0.0
      %1058 = vmatpush1.msra.mxu0 %v962
      %1059 = vmatprep.subr.mxu0 0.0
      %1060 = vmatpush1.msra.mxu0 %v963
      %1061 = vmatprep.subr.mxu0 0.0
      %1062 = vmatpush1.msra.mxu0 %v964
      %1063 = vmatprep.subr.mxu0 0.0
      %1064 = vmatpush1.msra.mxu0 %v965
      %1065 = vmatprep.subr.mxu0 0.0
      %1066 = vmatpush1.msra.mxu0 %v966
      %1067 = vmatprep.subr.mxu0 0.0
      %1068 = vmatpush1.msra.mxu0 %v967
      %1069 = vmatprep.mubr.f32.mxu0 %v933
      %1070 = vmatmul.mubr.f32.gmra.mrb[0].mxu0 %v932
      %v1071 = vpop.f32.mrb[0].mxu0
      %v1072 = vadd.f32 %v1004, %v1071
      %v1073 = vpop.f32.mrb[0].mxu0
      %1074 = vdwg.mxu0
      %1075 = vmatprep.subr.mxu0 0.0
      %1076 = vmatpush1.msra.mxu0 %v968
      %1077 = vmatprep.subr.mxu0 0.0
      %1078 = vmatpush1.msra.mxu0 %v969
      %1079 = vmatprep.subr.mxu0 0.0
      %1080 = vmatpush1.msra.mxu0 %v970
      %1081 = vmatprep.subr.mxu0 0.0
      %1082 = vmatpush1.msra.mxu0 %v971
      %1083 = vmatprep.subr.mxu0 0.0
      %1084 = vmatpush1.msra.mxu0 %v972
      %1085 = vmatprep.subr.mxu0 0.0
      %1086 = vmatpush1.msra.mxu0 %v973
      %1087 = vmatprep.subr.mxu0 0.0
      %1088 = vmatpush1.msra.mxu0 %v974
      %1089 = vmatprep.subr.mxu0 0.0
      %1090 = vmatpush1.msra.mxu0 %v975
      %1091 = vmatprep.subr.mxu0 0.0
      %1092 = vmatpush1.msra.mxu0 %v976
      %1093 = vmatprep.subr.mxu0 0.0
      %1094 = vmatpush1.msra.mxu0 %v977
      %1095 = vmatprep.subr.mxu0 0.0
      %1096 = vmatpush1.msra.mxu0 %v978
      %1097 = vmatprep.subr.mxu0 0.0
      %1098 = vmatpush1.msra.mxu0 %v979
      %1099 = vmatprep.subr.mxu0 0.0
      %1100 = vmatpush1.msra.mxu0 %v980
      %1101 = vmatprep.subr.mxu0 0.0
      %1102 = vmatpush1.msra.mxu0 %v981
      %1103 = vmatprep.subr.mxu0 0.0
      %1104 = vmatpush1.msra.mxu0 %v982
      %1105 = vmatprep.subr.mxu0 0.0
      %1106 = vmatpush1.msra.mxu0 %v983
      %1107 = vmatprep.subr.mxu0 0.0
      %1108 = vmatpush1.msra.mxu0 %v984
      %1109 = vmatprep.subr.mxu0 0.0
      %1110 = vmatpush1.msra.mxu0 %v985
      %1111 = vmatprep.subr.mxu0 0.0
      %1112 = vmatpush1.msra.mxu0 %v986
      %1113 = vmatprep.subr.mxu0 0.0
      %1114 = vmatpush1.msra.mxu0 %v987
      %1115 = vmatprep.subr.mxu0 0.0
      %1116 = vmatpush1.msra.mxu0 %v988
      %1117 = vmatprep.subr.mxu0 0.0
      %1118 = vmatpush1.msra.mxu0 %v989
      %1119 = vmatprep.subr.mxu0 0.0
      %1120 = vmatpush1.msra.mxu0 %v990
      %1121 = vmatprep.subr.mxu0 0.0
      %1122 = vmatpush1.msra.mxu0 %v991
      %1123 = vmatprep.subr.mxu0 0.0
      %1124 = vmatpush1.msra.mxu0 %v992
      %1125 = vmatprep.subr.mxu0 0.0
      %1126 = vmatpush1.msra.mxu0 %v993
      %1127 = vmatprep.subr.mxu0 0.0
      %1128 = vmatpush1.msra.mxu0 %v994
      %1129 = vmatprep.subr.mxu0 0.0
      %1130 = vmatpush1.msra.mxu0 %v995
      %1131 = vmatprep.subr.mxu0 0.0
      %1132 = vmatpush1.msra.mxu0 %v996
      %1133 = vmatprep.subr.mxu0 0.0
      %1134 = vmatpush1.msra.mxu0 %v997
      %1135 = vmatprep.subr.mxu0 0.0
      %1136 = vmatpush1.msra.mxu0 %v998
      %1137 = vmatprep.subr.mxu0 0.0
      %1138 = vmatpush1.msra.mxu0 %v999
      %1139 = vmatprep.mubr.f32.mxu0 %v935
      %1140 = vmatmul.mubr.f32.gmra.mrb[0].mxu0 %v934
      %v1141 = vpop.f32.mrb[0].mxu0
      %v1142 = vadd.f32 %v1072, %v1141
      %v1143 = vpop.f32.mrb[0].mxu0
      %1144 = vdwg.mxu0
      %1149 = vrot.lane.b32.xlu0 %v641, 92
      %v1150 = vpop.permute.xlu0 %1149
      %1151 = vrot.lane.b32.xlu0 %v642, 92
      %v1152 = vpop.permute.xlu0 %1151
      %1153 = vrot.lane.b32.xlu0 %v643, 92
      %v1154 = vpop.permute.xlu0 %1153
      %1155 = vrot.lane.b32.xlu0 %v644, 92
      %v1156 = vpop.permute.xlu0 %1155
      %v1162 = vsel %vm396, %v1142, 0
      %1164 = vmatprep.subr.mxu0 0.0
      %1165 = vmatpush1.msra.mxu0 %v1150
      %1166 = vmatprep.subr.mxu0 0.0
      %1167 = vmatpush1.msra.mxu0 %v1152
      %1168 = vmatprep.subr.mxu0 0.0
      %1169 = vmatpush1.msra.mxu0 %v1154
      %1170 = vmatprep.subr.mxu0 0.0
      %1171 = vmatpush1.msra.mxu0 %v1156
      %1172 = vmatprep.subr.mxu0 0.0
      %1173 = vmatpush1.msra.mxu0 0.0
      %1174 = vmatprep.subr.mxu0 0.0
      %1175 = vmatpush1.msra.mxu0 0.0
      %1176 = vmatprep.subr.mxu0 0.0
      %1177 = vmatpush1.msra.mxu0 0.0
      %1178 = vmatprep.subr.mxu0 0.0
      %1179 = vmatpush1.msra.mxu0 0.0
      %1180 = vmatprep.subr.mxu0 0.0
      %1181 = vmatpush1.msra.mxu0 0.0
      %1182 = vmatprep.subr.mxu0 0.0
      %1183 = vmatpush1.msra.mxu0 0.0
      %1184 = vmatprep.subr.mxu0 0.0
      %1185 = vmatpush1.msra.mxu0 0.0
      %1186 = vmatprep.subr.mxu0 0.0
      %1187 = vmatpush1.msra.mxu0 0.0
      %1188 = vmatprep.subr.mxu0 0.0
      %1189 = vmatpush1.msra.mxu0 0.0
      %1190 = vmatprep.subr.mxu0 0.0
      %1191 = vmatpush1.msra.mxu0 0.0
      %1192 = vmatprep.subr.mxu0 0.0
      %1193 = vmatpush1.msra.mxu0 0.0
      %1194 = vmatprep.subr.mxu0 0.0
      %1195 = vmatpush1.msra.mxu0 0.0
      %1196 = vmatprep.subr.mxu0 0.0
      %1197 = vmatpush1.msra.mxu0 0.0
      %1198 = vmatprep.subr.mxu0 0.0
      %1199 = vmatpush1.msra.mxu0 0.0
      %1200 = vmatprep.subr.mxu0 0.0
      %1201 = vmatpush1.msra.mxu0 0.0
      %1202 = vmatprep.subr.mxu0 0.0
      %1203 = vmatpush1.msra.mxu0 0.0
      %1204 = vmatprep.subr.mxu0 0.0
      %1205 = vmatpush1.msra.mxu0 0.0
      %1206 = vmatprep.subr.mxu0 0.0
      %1207 = vmatpush1.msra.mxu0 0.0
      %1208 = vmatprep.subr.mxu0 0.0
      %1209 = vmatpush1.msra.mxu0 0.0
      %1210 = vmatprep.subr.mxu0 0.0
      %1211 = vmatpush1.msra.mxu0 0.0
      %1212 = vmatprep.subr.mxu0 0.0
      %1213 = vmatpush1.msra.mxu0 0.0
      %1214 = vmatprep.subr.mxu0 0.0
      %1215 = vmatpush1.msra.mxu0 0.0
      %1216 = vmatprep.subr.mxu0 0.0
      %1217 = vmatpush1.msra.mxu0 0.0
      %1218 = vmatprep.subr.mxu0 0.0
      %1219 = vmatpush1.msra.mxu0 0.0
      %1220 = vmatprep.subr.mxu0 0.0
      %1221 = vmatpush1.msra.mxu0 0.0
      %1222 = vmatprep.subr.mxu0 0.0
      %1223 = vmatpush1.msra.mxu0 0.0
      %1224 = vmatprep.subr.mxu0 0.0
      %1225 = vmatpush1.msra.mxu0 0.0
      %1226 = vmatprep.subr.mxu0 0.0
      %1227 = vmatpush1.msra.mxu0 0.0
      %1228 = vmatprep.mubr.f32.mxu0 0.0
      %1229 = vmatmul.mubr.f32.gmra.mrb[0].mxu0 %v1162
      %v1230 = vpop.f32.mrb[0].mxu0
      %v1231 = vadd.f32 0.0, %v1230
      %v1232 = vpop.f32.mrb[0].mxu0
      %1233 = vdwg.mxu0
      %v1234 = vsel %vm396, %v1142, -inf
      %1235 = vmax.xlane.f32.xlu0 %v1234
      %v1236 = vpop.xlane.xlu0 %1235
      %v1237 = vsub.f32 %v1142, %v1236
      %v1238 = vmul.f32 %v1237, 1.442695
      %v1239 = vpow.pop %v1238
      %1240 = vrot.lane.b32.xlu0 %v641, 96
      %v1241 = vpop.permute.xlu0 %1240
      %1242 = vrot.lane.b32.xlu0 %v642, 96
      %v1243 = vpop.permute.xlu0 %1242
      %1244 = vrot.lane.b32.xlu0 %v643, 96
      %v1245 = vpop.permute.xlu0 %1244
      %1246 = vrot.lane.b32.xlu0 %v644, 96
      %v1247 = vpop.permute.xlu0 %1246
      %v1253 = vsel %vm396, %v1239, 0
      %1255 = vmatprep.subr.mxu0 0.0
      %1256 = vmatpush1.msra.mxu0 %v1241
      %1257 = vmatprep.subr.mxu0 0.0
      %1258 = vmatpush1.msra.mxu0 %v1243
      %1259 = vmatprep.subr.mxu0 0.0
      %1260 = vmatpush1.msra.mxu0 %v1245
      %1261 = vmatprep.subr.mxu0 0.0
      %1262 = vmatpush1.msra.mxu0 %v1247
      %1263 = vmatprep.subr.mxu0 0.0
      %1264 = vmatpush1.msra.mxu0 0.0
      %1265 = vmatprep.subr.mxu0 0.0
      %1266 = vmatpush1.msra.mxu0 0.0
      %1267 = vmatprep.subr.mxu0 0.0
      %1268 = vmatpush1.msra.mxu0 0.0
      %1269 = vmatprep.subr.mxu0 0.0
      %1270 = vmatpush1.msra.mxu0 0.0
      %1271 = vmatprep.subr.mxu0 0.0
      %1272 = vmatpush1.msra.mxu0 0.0
      %1273 = vmatprep.subr.mxu0 0.0
      %1274 = vmatpush1.msra.mxu0 0.0
      %1275 = vmatprep.subr.mxu0 0.0
      %1276 = vmatpush1.msra.mxu0 0.0
      %1277 = vmatprep.subr.mxu0 0.0
      %1278 = vmatpush1.msra.mxu0 0.0
      %1279 = vmatprep.subr.mxu0 0.0
      %1280 = vmatpush1.msra.mxu0 0.0
      %1281 = vmatprep.subr.mxu0 0.0
      %1282 = vmatpush1.msra.mxu0 0.0
      %1283 = vmatprep.subr.mxu0 0.0
      %1284 = vmatpush1.msra.mxu0 0.0
      %1285 = vmatprep.subr.mxu0 0.0
      %1286 = vmatpush1.msra.mxu0 0.0
      %1287 = vmatprep.subr.mxu0 0.0
      %1288 = vmatpush1.msra.mxu0 0.0
      %1289 = vmatprep.subr.mxu0 0.0
      %1290 = vmatpush1.msra.mxu0 0.0
      %1291 = vmatprep.subr.mxu0 0.0
      %1292 = vmatpush1.msra.mxu0 0.0
      %1293 = vmatprep.subr.mxu0 0.0
      %1294 = vmatpush1.msra.mxu0 0.0
      %1295 = vmatprep.subr.mxu0 0.0
      %1296 = vmatpush1.msra.mxu0 0.0
      %1297 = vmatprep.subr.mxu0 0.0
      %1298 = vmatpush1.msra.mxu0 0.0
      %1299 = vmatprep.subr.mxu0 0.0
      %1300 = vmatpush1.msra.mxu0 0.0
      %1301 = vmatprep.subr.mxu0 0.0
      %1302 = vmatpush1.msra.mxu0 0.0
      %1303 = vmatprep.subr.mxu0 0.0
      %1304 = vmatpush1.msra.mxu0 0.0
      %1305 = vmatprep.subr.mxu0 0.0
      %1306 = vmatpush1.msra.mxu0 0.0
      %1307 = vmatprep.subr.mxu0 0.0
      %1308 = vmatpush1.msra.mxu0 0.0
      %1309 = vmatprep.subr.mxu0 0.0
      %1310 = vmatpush1.msra.mxu0 0.0
      %1311 = vmatprep.subr.mxu0 0.0
      %1312 = vmatpush1.msra.mxu0 0.0
      %1313 = vmatprep.subr.mxu0 0.0
      %1314 = vmatpush1.msra.mxu0 0.0
      %1315 = vmatprep.subr.mxu0 0.0
      %1316 = vmatpush1.msra.mxu0 0.0
      %1317 = vmatprep.subr.mxu0 0.0
      %1318 = vmatpush1.msra.mxu0 0.0
      %1319 = vmatprep.mubr.f32.mxu0 0.0
      %1320 = vmatmul.mubr.f32.gmra.mrb[0].mxu0 %v1253
      %v1321 = vpop.f32.mrb[0].mxu0
      %v1322 = vadd.f32 0.0, %v1321
      %v1323 = vpop.f32.mrb[0].mxu0
      %1324 = vdwg.mxu0
      %v1325 = vrcp.pop %v1322
      %vm1326 = vcmask 31744
      %v1328 = vsel %vm1326, %v1325, 0
      %v1330 = vsel %vm1326, %v1241, 0
      %v1332 = vsel %vm1326, %v1243, 0
      %v1334 = vsel %vm1326, %v1245, 0
      %v1336 = vsel %vm1326, %v1247, 0
      %1338 = vmatprep.subr.mxu0 0.0
      %1339 = vmatpush1.xpose.msra.mxu0 %v1330
      %1340 = vmatprep.subr.mxu0 0.0
      %1341 = vmatpush1.xpose.msra.mxu0 %v1332
      %1342 = vmatprep.subr.mxu0 0.0
      %1343 = vmatpush1.xpose.msra.mxu0 %v1334
      %1344 = vmatprep.subr.mxu0 0.0
      %1345 = vmatpush1.xpose.msra.mxu0 %v1336
      %1346 = vmatprep.subr.mxu0 0.0
      %1347 = vmatpush1.xpose.msra.mxu0 0.0
      %1348 = vmatprep.subr.mxu0 0.0
      %1349 = vmatpush1.xpose.msra.mxu0 0.0
      %1350 = vmatprep.subr.mxu0 0.0
      %1351 = vmatpush1.xpose.msra.mxu0 0.0
      %1352 = vmatprep.subr.mxu0 0.0
      %1353 = vmatpush1.xpose.msra.mxu0 0.0
      %1354 = vmatprep.subr.mxu0 0.0
      %1355 = vmatpush1.xpose.msra.mxu0 0.0
      %1356 = vmatprep.subr.mxu0 0.0
      %1357 = vmatpush1.xpose.msra.mxu0 0.0
      %1358 = vmatprep.subr.mxu0 0.0
      %1359 = vmatpush1.xpose.msra.mxu0 0.0
      %1360 = vmatprep.subr.mxu0 0.0
      %1361 = vmatpush1.xpose.msra.mxu0 0.0
      %1362 = vmatprep.subr.mxu0 0.0
      %1363 = vmatpush1.xpose.msra.mxu0 0.0
      %1364 = vmatprep.subr.mxu0 0.0
      %1365 = vmatpush1.xpose.msra.mxu0 0.0
      %1366 = vmatprep.subr.mxu0 0.0
      %1367 = vmatpush1.xpose.msra.mxu0 0.0
      %1368 = vmatprep.subr.mxu0 0.0
      %1369 = vmatpush1.xpose.msra.mxu0 0.0
      %1370 = vmatprep.subr.mxu0 0.0
      %1371 = vmatpush1.xpose.msra.mxu0 0.0
      %1372 = vmatprep.subr.mxu0 0.0
      %1373 = vmatpush1.xpose.msra.mxu0 0.0
      %1374 = vmatprep.subr.mxu0 0.0
      %1375 = vmatpush1.xpose.msra.mxu0 0.0
      %1376 = vmatprep.subr.mxu0 0.0
      %1377 = vmatpush1.xpose.msra.mxu0 0.0
      %1378 = vmatprep.subr.mxu0 0.0
      %1379 = vmatpush1.xpose.msra.mxu0 0.0
      %1380 = vmatprep.subr.mxu0 0.0
      %1381 = vmatpush1.xpose.msra.mxu0 0.0
      %1382 = vmatprep.subr.mxu0 0.0
      %1383 = vmatpush1.xpose.msra.mxu0 0.0
      %1384 = vmatprep.subr.mxu0 0.0
      %1385 = vmatpush1.xpose.msra.mxu0 0.0
      %1386 = vmatprep.subr.mxu0 0.0
      %1387 = vmatpush1.xpose.msra.mxu0 0.0
      %1388 = vmatprep.subr.mxu0 0.0
      %1389 = vmatpush1.xpose.msra.mxu0 0.0
      %1390 = vmatprep.subr.mxu0 0.0
      %1391 = vmatpush1.xpose.msra.mxu0 0.0
      %1392 = vmatprep.subr.mxu0 0.0
      %1393 = vmatpush1.xpose.msra.mxu0 0.0
      %1394 = vmatprep.subr.mxu0 0.0
      %1395 = vmatpush1.xpose.msra.mxu0 0.0
      %1396 = vmatprep.subr.mxu0 0.0
      %1397 = vmatpush1.xpose.msra.mxu0 0.0
      %1398 = vmatprep.subr.mxu0 0.0
      %1399 = vmatpush1.xpose.msra.mxu0 0.0
      %1400 = vmatprep.subr.mxu0 0.0
      %1401 = vmatpush1.xpose.msra.mxu0 0.0
      %1402 = vmatprep.mubr.f32.mxu0 0.0
      %1403 = vmatmul.mubr.f32.gmra.mrb[0].mxu0 %v1328
      %v1404 = vpop.f32.mrb[0].mxu0
      %v1405 = vadd.f32 0.0, %v1404
      %v1406 = vpop.f32.mrb[0].mxu0
      %1407 = vdwg.mxu0
      %v1408 = vmul.f32 %v1239, %v1405
      %v1410 = vsel %vm396, %v1408, 0
      %1412 = vmatprep.subr.mxu0 0.0
      %1413 = vmatpush1.msra.mxu0 %v649
      %1414 = vmatprep.subr.mxu0 0.0
      %1415 = vmatpush1.msra.mxu0 %v650
      %1416 = vmatprep.subr.mxu0 0.0
      %1417 = vmatpush1.msra.mxu0 %v651
      %1418 = vmatprep.subr.mxu0 0.0
      %1419 = vmatpush1.msra.mxu0 %v652
      %1420 = vmatprep.subr.mxu0 0.0
      %1421 = vmatpush1.msra.mxu0 0.0
      %1422 = vmatprep.subr.mxu0 0.0
      %1423 = vmatpush1.msra.mxu0 0.0
      %1424 = vmatprep.subr.mxu0 0.0
      %1425 = vmatpush1.msra.mxu0 0.0
      %1426 = vmatprep.subr.mxu0 0.0
      %1427 = vmatpush1.msra.mxu0 0.0
      %1428 = vmatprep.subr.mxu0 0.0
      %1429 = vmatpush1.msra.mxu0 0.0
      %1430 = vmatprep.subr.mxu0 0.0
      %1431 = vmatpush1.msra.mxu0 0.0
      %1432 = vmatprep.subr.mxu0 0.0
      %1433 = vmatpush1.msra.mxu0 0.0
      %1434 = vmatprep.subr.mxu0 0.0
      %1435 = vmatpush1.msra.mxu0 0.0
      %1436 = vmatprep.subr.mxu0 0.0
      %1437 = vmatpush1.msra.mxu0 0.0
      %1438 = vmatprep.subr.mxu0 0.0
      %1439 = vmatpush1.msra.mxu0 0.0
      %1440 = vmatprep.subr.mxu0 0.0
      %1441 = vmatpush1.msra.mxu0 0.0
      %1442 = vmatprep.subr.mxu0 0.0
      %1443 = vmatpush1.msra.mxu0 0.0
      %1444 = vmatprep.subr.mxu0 0.0
      %1445 = vmatpush1.msra.mxu0 0.0
      %1446 = vmatprep.subr.mxu0 0.0
      %1447 = vmatpush1.msra.mxu0 0.0
      %1448 = vmatprep.subr.mxu0 0.0
      %1449 = vmatpush1.msra.mxu0 0.0
      %1450 = vmatprep.subr.mxu0 0.0
      %1451 = vmatpush1.msra.mxu0 0.0
      %1452 = vmatprep.subr.mxu0 0.0
      %1453 = vmatpush1.msra.mxu0 0.0
      %1454 = vmatprep.subr.mxu0 0.0
      %1455 = vmatpush1.msra.mxu0 0.0
      %1456 = vmatprep.subr.mxu0 0.0
      %1457 = vmatpush1.msra.mxu0 0.0
      %1458 = vmatprep.subr.mxu0 0.0
      %1459 = vmatpush1.msra.mxu0 0.0
      %1460 = vmatprep.subr.mxu0 0.0
      %1461 = vmatpush1.msra.mxu0 0.0
      %1462 = vmatprep.subr.mxu0 0.0
      %1463 = vmatpush1.msra.mxu0 0.0
      %1464 = vmatprep.subr.mxu0 0.0
      %1465 = vmatpush1.msra.mxu0 0.0
      %1466 = vmatprep.subr.mxu0 0.0
      %1467 = vmatpush1.msra.mxu0 0.0
      %1468 = vmatprep.subr.mxu0 0.0
      %1469 = vmatpush1.msra.mxu0 0.0
      %1470 = vmatprep.subr.mxu0 0.0
      %1471 = vmatpush1.msra.mxu0 0.0
      %1472 = vmatprep.subr.mxu0 0.0
      %1473 = vmatpush1.msra.mxu0 0.0
      %1474 = vmatprep.subr.mxu0 0.0
      %1475 = vmatpush1.msra.mxu0 0.0
      %1476 = vmatprep.mubr.f32.mxu0 0.0
      %1477 = vmatmul.mubr.f32.gmra.mrb[0].mxu0 %v1410
      %v1478 = vpop.f32.mrb[0].mxu0
      %v1479 = vadd.f32 0.0, %v1478
      %v1480 = vpop.f32.mrb[0].mxu0
      %1481 = vdwg.mxu0
      %v1482 = vld [vmem:[%s6] sm:$0xff]
      %v1483 = vld [vmem:[%s6 + $0x8] sm:$0xff]
      %v1484 = vld [vmem:[%s6 + $0x10] sm:$0xff]
      %v1485 = vld [vmem:[%s6 + $0x18] sm:$0xff]
      %v1486 = vld [vmem:[%s6 + $0x20] sm:$0xff]
      %v1487 = vld [vmem:[%s6 + $0x28] sm:$0xff]
      %v1488 = vld [vmem:[%s6 + $0x30] sm:$0xff]
      %v1489 = vld [vmem:[%s6 + $0x38] sm:$0xff]
      %v1490 = vld [vmem:[%s6 + $0x40] sm:$0xff]
      %v1491 = vld [vmem:[%s6 + $0x48] sm:$0xff]
      %v1492 = vld [vmem:[%s6 + $0x50] sm:$0xff]
      %v1493 = vld [vmem:[%s6 + $0x58] sm:$0xff]
      %v1494 = vld [vmem:[%s6 + $0x60] sm:$0x1]
      %v1495 = vld [vmem:[%s6 + $0x61] sm:$0x1]
      %v1496 = vld [vmem:[%s6 + $0x62] sm:$0x1]
      %v1497 = vld [vmem:[%s6 + $0x63] sm:$0x1]
      %v1498 = vld [vmem:[%s6 + $0x64] sm:$0x1]
      %v1499 = vld [vmem:[%s6 + $0x65] sm:$0x1]
      %v1500 = vlaneseq
      %v1501 = vshrl.u32 %v1500, 7
      %v1502 = vsub.s32 0, %v1501
      %v1503 = vrot.slane %v1494, %v1502
      %v1505 = vsel %vm396, %v1479, 0
      %1507 = vmatprep.subr.mxu0 0.0
      %1508 = vmatpush1.msra.mxu0 %v1482
      %1509 = vmatprep.subr.mxu0 0.0
      %1510 = vmatpush1.msra.mxu0 %v1483
      %1511 = vmatprep.subr.mxu0 0.0
      %1512 = vmatpush1.msra.mxu0 %v1484
      %1513 = vmatprep.subr.mxu0 0.0
      %1514 = vmatpush1.msra.mxu0 %v1485
      %1515 = vmatprep.subr.mxu0 0.0
      %1516 = vmatpush1.msra.mxu0 0.0
      %1517 = vmatprep.subr.mxu0 0.0
      %1518 = vmatpush1.msra.mxu0 0.0
      %1519 = vmatprep.subr.mxu0 0.0
      %1520 = vmatpush1.msra.mxu0 0.0
      %1521 = vmatprep.subr.mxu0 0.0
      %1522 = vmatpush1.msra.mxu0 0.0
      %1523 = vmatprep.subr.mxu0 0.0
      %1524 = vmatpush1.msra.mxu0 0.0
      %1525 = vmatprep.subr.mxu0 0.0
      %1526 = vmatpush1.msra.mxu0 0.0
      %1527 = vmatprep.subr.mxu0 0.0
      %1528 = vmatpush1.msra.mxu0 0.0
      %1529 = vmatprep.subr.mxu0 0.0
      %1530 = vmatpush1.msra.mxu0 0.0
      %1531 = vmatprep.subr.mxu0 0.0
      %1532 = vmatpush1.msra.mxu0 0.0
      %1533 = vmatprep.subr.mxu0 0.0
      %1534 = vmatpush1.msra.mxu0 0.0
      %1535 = vmatprep.subr.mxu0 0.0
      %1536 = vmatpush1.msra.mxu0 0.0
      %1537 = vmatprep.subr.mxu0 0.0
      %1538 = vmatpush1.msra.mxu0 0.0
      %1539 = vmatprep.subr.mxu0 0.0
      %1540 = vmatpush1.msra.mxu0 0.0
      %1541 = vmatprep.subr.mxu0 0.0
      %1542 = vmatpush1.msra.mxu0 0.0
      %1543 = vmatprep.subr.mxu0 0.0
      %1544 = vmatpush1.msra.mxu0 0.0
      %1545 = vmatprep.subr.mxu0 0.0
      %1546 = vmatpush1.msra.mxu0 0.0
      %1547 = vmatprep.subr.mxu0 0.0
      %1548 = vmatpush1.msra.mxu0 0.0
      %1549 = vmatprep.subr.mxu0 0.0
      %1550 = vmatpush1.msra.mxu0 0.0
      %1551 = vmatprep.subr.mxu0 0.0
      %1552 = vmatpush1.msra.mxu0 0.0
      %1553 = vmatprep.subr.mxu0 0.0
      %1554 = vmatpush1.msra.mxu0 0.0
      %1555 = vmatprep.subr.mxu0 0.0
      %1556 = vmatpush1.msra.mxu0 0.0
      %1557 = vmatprep.subr.mxu0 0.0
      %1558 = vmatpush1.msra.mxu0 0.0
      %1559 = vmatprep.subr.mxu0 0.0
      %1560 = vmatpush1.msra.mxu0 0.0
      %1561 = vmatprep.subr.mxu0 0.0
      %1562 = vmatpush1.msra.mxu0 0.0
      %1563 = vmatprep.subr.mxu0 0.0
      %1564 = vmatpush1.msra.mxu0 0.0
      %1565 = vmatprep.subr.mxu0 0.0
      %1566 = vmatpush1.msra.mxu0 0.0
      %1567 = vmatprep.subr.mxu0 0.0
      %1568 = vmatpush1.msra.mxu0 0.0
      %1569 = vmatprep.subr.mxu0 0.0
      %1570 = vmatpush1.msra.mxu0 0.0
      %1571 = vmatprep.mubr.f32.mxu0 0.0
      %1572 = vmatmul.mubr.f32.gmra.mrb[0].mxu0 %v1505
      %v1573 = vpop.f32.mrb[0].mxu0
      %v1574 = vadd.f32 %v1503, %v1573
      %v1575 = vpop.f32.mrb[0].mxu0
      %1576 = vdwg.mxu0
      %v1577 = vadd.f32 %v389, %v1574
      %v1578 = vsel %vm396, %v1577, 0.0
      %v1579 = vrot.slane %v1578, 4
      %v1580 = vadd.f32 %v1578, %v1579
      %v1581 = vrot.slane %v1580, 2
      %v1582 = vadd.f32 %v1580, %v1581
      %v1583 = vrot.slane %v1582, 1
      %v1584 = vadd.f32 %v1582, %v1583
      %v1585 = vrcp.pop 8.0
      %v1586 = vmul.f32 %v1584, %v1585
      %v1587 = vsub.f32 %v1577, %v1586
      %v1588 = vmul.f32 %v1587, %v1587
      %v1589 = vsel %vm396, %v1588, 0.0
      %v1590 = vrot.slane %v1589, 4
      %v1591 = vadd.f32 %v1589, %v1590
      %v1592 = vrot.slane %v1591, 2
      %v1593 = vadd.f32 %v1591, %v1592
      %v1594 = vrot.slane %v1593, 1
      %v1595 = vadd.f32 %v1593, %v1594
      %v1596 = vmul.f32 %v1595, %v1585
      %v1597 = vadd.f32 %v1596, 1e-05
      %v1598 = vrsqrt.pop %v1597
      %v1599 = vmul.f32 %v1587, %v1598
      %v1600 = vlaneseq
      %v1601 = vshrl.u32 %v1600, 7
      %v1602 = vsub.s32 0, %v1601
      %v1603 = vrot.slane %v1495, %v1602
      %v1604 = vmul.f32 %v1599, %v1603
      %v1605 = vlaneseq
      %v1606 = vshrl.u32 %v1605, 7
      %v1607 = vsub.s32 0, %v1606
      %v1608 = vrot.slane %v1496, %v1607
      %v1609 = vadd.f32 %v1604, %v1608
      %v1610 = vld [vmem:[%s7] sm:$0xff]
      %v1611 = vld [vmem:[%s7 + $0x8] sm:$0xff]
      %v1612 = vld [vmem:[%s7 + $0x10] sm:$0xff]
      %v1613 = vld [vmem:[%s7 + $0x18] sm:$0xff]
      %v1614 = vld [vmem:[%s7 + $0x20] sm:$0x1]
      %v1615 = vlaneseq
      %v1616 = vshrl.u32 %v1615, 7
      %v1617 = vsub.s32 0, %v1616
      %v1618 = vrot.slane %v1614, %v1617
      %v1620 = vsel %vm396, %v1609, 0
      %1622 = vmatprep.subr.mxu0 0.0
      %1623 = vmatpush1.msra.mxu0 %v1610
      %1624 = vmatprep.subr.mxu0 0.0
      %1625 = vmatpush1.msra.mxu0 %v1611
      %1626 = vmatprep.subr.mxu0 0.0
      %1627 = vmatpush1.msra.mxu0 %v1612
      %1628 = vmatprep.subr.mxu0 0.0
      %1629 = vmatpush1.msra.mxu0 %v1613
      %1630 = vmatprep.subr.mxu0 0.0
      %1631 = vmatpush1.msra.mxu0 0.0
      %1632 = vmatprep.subr.mxu0 0.0
      %1633 = vmatpush1.msra.mxu0 0.0
      %1634 = vmatprep.subr.mxu0 0.0
      %1635 = vmatpush1.msra.mxu0 0.0
      %1636 = vmatprep.subr.mxu0 0.0
      %1637 = vmatpush1.msra.mxu0 0.0
      %1638 = vmatprep.subr.mxu0 0.0
      %1639 = vmatpush1.msra.mxu0 0.0
      %1640 = vmatprep.subr.mxu0 0.0
      %1641 = vmatpush1.msra.mxu0 0.0
      %1642 = vmatprep.subr.mxu0 0.0
      %1643 = vmatpush1.msra.mxu0 0.0
      %1644 = vmatprep.subr.mxu0 0.0
      %1645 = vmatpush1.msra.mxu0 0.0
      %1646 = vmatprep.subr.mxu0 0.0
      %1647 = vmatpush1.msra.mxu0 0.0
      %1648 = vmatprep.subr.mxu0 0.0
      %1649 = vmatpush1.msra.mxu0 0.0
      %1650 = vmatprep.subr.mxu0 0.0
      %1651 = vmatpush1.msra.mxu0 0.0
      %1652 = vmatprep.subr.mxu0 0.0
      %1653 = vmatpush1.msra.mxu0 0.0
      %1654 = vmatprep.subr.mxu0 0.0
      %1655 = vmatpush1.msra.mxu0 0.0
      %1656 = vmatprep.subr.mxu0 0.0
      %1657 = vmatpush1.msra.mxu0 0.0
      %1658 = vmatprep.subr.mxu0 0.0
      %1659 = vmatpush1.msra.mxu0 0.0
      %1660 = vmatprep.subr.mxu0 0.0
      %1661 = vmatpush1.msra.mxu0 0.0
      %1662 = vmatprep.subr.mxu0 0.0
      %1663 = vmatpush1.msra.mxu0 0.0
      %1664 = vmatprep.subr.mxu0 0.0
      %1665 = vmatpush1.msra.mxu0 0.0
      %1666 = vmatprep.subr.mxu0 0.0
      %1667 = vmatpush1.msra.mxu0 0.0
      %1668 = vmatprep.subr.mxu0 0.0
      %1669 = vmatpush1.msra.mxu0 0.0
      %1670 = vmatprep.subr.mxu0 0.0
      %1671 = vmatpush1.msra.mxu0 0.0
      %1672 = vmatprep.subr.mxu0 0.0
      %1673 = vmatpush1.msra.mxu0 0.0
      %1674 = vmatprep.subr.mxu0 0.0
      %1675 = vmatpush1.msra.mxu0 0.0
      %1676 = vmatprep.subr.mxu0 0.0
      %1677 = vmatpush1.msra.mxu0 0.0
      %1678 = vmatprep.subr.mxu0 0.0
      %1679 = vmatpush1.msra.mxu0 0.0
      %1680 = vmatprep.subr.mxu0 0.0
      %1681 = vmatpush1.msra.mxu0 0.0
      %1682 = vmatprep.subr.mxu0 0.0
      %1683 = vmatpush1.msra.mxu0 0.0
      %1684 = vmatprep.subr.mxu0 0.0
      %1685 = vmatpush1.msra.mxu0 0.0
      %1686 = vmatprep.mubr.f32.mxu0 0.0
      %1687 = vmatmul.mubr.f32.gmra.mrb[0].mxu0 %v1620
      %v1688 = vpop.f32.mrb[0].mxu0
      %v1689 = vadd.f32 %v1618, %v1688
      %v1690 = vpop.f32.mrb[0].mxu0
      %1691 = vdwg.mxu0
      %v1692 = vmax.f32 %v1689, 0.0
      %v1693 = vlaneseq
      %v1694 = vshrl.u32 %v1693, 7
      %v1695 = vsub.s32 0, %v1694
      %v1696 = vrot.slane %v1499, %v1695
      %vm1697 = vcmask 523264
      %v1699 = vsel %vm1697, %v1692, 0
      %1701 = vmatprep.subr.mxu0 0.0
      %1702 = vmatpush1.msra.mxu0 %v1486
      %1703 = vmatprep.subr.mxu0 0.0
      %1704 = vmatpush1.msra.mxu0 %v1487
      %1705 = vmatprep.subr.mxu0 0.0
      %1706 = vmatpush1.msra.mxu0 %v1488
      %1707 = vmatprep.subr.mxu0 0.0
      %1708 = vmatpush1.msra.mxu0 %v1489
      %1709 = vmatprep.subr.mxu0 0.0
      %1710 = vmatpush1.msra.mxu0 %v1490
      %1711 = vmatprep.subr.mxu0 0.0
      %1712 = vmatpush1.msra.mxu0 %v1491
      %1713 = vmatprep.subr.mxu0 0.0
      %1714 = vmatpush1.msra.mxu0 %v1492
      %1715 = vmatprep.subr.mxu0 0.0
      %1716 = vmatpush1.msra.mxu0 %v1493
      %1717 = vmatprep.subr.mxu0 0.0
      %1718 = vmatpush1.msra.mxu0 0.0
      %1719 = vmatprep.subr.mxu0 0.0
      %1720 = vmatpush1.msra.mxu0 0.0
      %1721 = vmatprep.subr.mxu0 0.0
      %1722 = vmatpush1.msra.mxu0 0.0
      %1723 = vmatprep.subr.mxu0 0.0
      %1724 = vmatpush1.msra.mxu0 0.0
      %1725 = vmatprep.subr.mxu0 0.0
      %1726 = vmatpush1.msra.mxu0 0.0
      %1727 = vmatprep.subr.mxu0 0.0
      %1728 = vmatpush1.msra.mxu0 0.0
      %1729 = vmatprep.subr.mxu0 0.0
      %1730 = vmatpush1.msra.mxu0 0.0
      %1731 = vmatprep.subr.mxu0 0.0
      %1732 = vmatpush1.msra.mxu0 0.0
      %1733 = vmatprep.subr.mxu0 0.0
      %1734 = vmatpush1.msra.mxu0 0.0
      %1735 = vmatprep.subr.mxu0 0.0
      %1736 = vmatpush1.msra.mxu0 0.0
      %1737 = vmatprep.subr.mxu0 0.0
      %1738 = vmatpush1.msra.mxu0 0.0
      %1739 = vmatprep.subr.mxu0 0.0
      %1740 = vmatpush1.msra.mxu0 0.0
      %1741 = vmatprep.subr.mxu0 0.0
      %1742 = vmatpush1.msra.mxu0 0.0
      %1743 = vmatprep.subr.mxu0 0.0
      %1744 = vmatpush1.msra.mxu0 0.0
      %1745 = vmatprep.subr.mxu0 0.0
      %1746 = vmatpush1.msra.mxu0 0.0
      %1747 = vmatprep.subr.mxu0 0.0
      %1748 = vmatpush1.msra.mxu0 0.0
      %1749 = vmatprep.subr.mxu0 0.0
      %1750 = vmatpush1.msra.mxu0 0.0
      %1751 = vmatprep.subr.mxu0 0.0
      %1752 = vmatpush1.msra.mxu0 0.0
      %1753 = vmatprep.subr.mxu0 0.0
      %1754 = vmatpush1.msra.mxu0 0.0
      %1755 = vmatprep.subr.mxu0 0.0
      %1756 = vmatpush1.msra.mxu0 0.0
      %1757 = vmatprep.subr.mxu0 0.0
      %1758 = vmatpush1.msra.mxu0 0.0
      %1759 = vmatprep.subr.mxu0 0.0
      %1760 = vmatpush1.msra.mxu0 0.0
      %1761 = vmatprep.subr.mxu0 0.0
      %1762 = vmatpush1.msra.mxu0 0.0
      %1763 = vmatprep.subr.mxu0 0.0
      %1764 = vmatpush1.msra.mxu0 0.0
      %1765 = vmatprep.mubr.f32.mxu0 0.0
      %1766 = vmatmul.mubr.f32.gmra.mrb[0].mxu0 %v1699
      %v1767 = vpop.f32.mrb[0].mxu0
      %v1768 = vadd.f32 %v1696, %v1767
      %v1769 = vpop.f32.mrb[0].mxu0
      %1770 = vdwg.mxu0
      %v1771 = vadd.f32 %v1609, %v1768
      %v1772 = vsel %vm396, %v1771, 0.0
      %v1773 = vrot.slane %v1772, 4
      %v1774 = vadd.f32 %v1772, %v1773
      %v1775 = vrot.slane %v1774, 2
      %v1776 = vadd.f32 %v1774, %v1775
      %v1777 = vrot.slane %v1776, 1
      %v1778 = vadd.f32 %v1776, %v1777
      %v1779 = vmul.f32 %v1778, %v1585
      %v1780 = vsub.f32 %v1771, %v1779
      %v1781 = vmul.f32 %v1780, %v1780
      %v1782 = vsel %vm396, %v1781, 0.0
      %v1783 = vrot.slane %v1782, 4
      %v1784 = vadd.f32 %v1782, %v1783
      %v1785 = vrot.slane %v1784, 2
      %v1786 = vadd.f32 %v1784, %v1785
      %v1787 = vrot.slane %v1786, 1
      %v1788 = vadd.f32 %v1786, %v1787
      %v1789 = vmul.f32 %v1788, %v1585
      %v1790 = vadd.f32 %v1789, 1e-05
      %v1791 = vrsqrt.pop %v1790
      %v1792 = vmul.f32 %v1780, %v1791
      %v1793 = vlaneseq
      %v1794 = vshrl.u32 %v1793, 7
      %v1795 = vsub.s32 0, %v1794
      %v1796 = vrot.slane %v1497, %v1795
      %v1797 = vmul.f32 %v1792, %v1796
      %v1798 = vlaneseq
      %v1799 = vshrl.u32 %v1798, 7
      %v1800 = vsub.s32 0, %v1799
      %v1801 = vrot.slane %v1498, %v1800
      %v1802 = vadd.f32 %v1797, %v1801
      %v1803 = vld [vmem:[%s8] sm:$0xff]
      %v1804 = vld [vmem:[%s8 + $0x8] sm:$0xff]
      %v1805 = vld [vmem:[%s8 + $0x10] sm:$0x1]
      %v1806 = vld [vmem:[%s8 + $0x11] sm:$0x1]
      %v1807 = vld [vmem:[%s8 + $0x12] sm:$0x1]
      %v1808 = vld [vmem:[%s8 + $0x13] sm:$0x1]
      %v1809 = vld [vmem:[%s8 + $0x14] sm:$0x1]
      %v1810 = vld [vmem:[%s8 + $0x15] sm:$0x1]
      %v1811 = vadd.f32 %v391, %v1231
      %vm1812 = vcmask 64512
      %v1813 = vsel %vm1812, %v1811, 0.0
      %1814 = vadd.xlane.f32.xlu0 %v1813
      %v1815 = vpop.xlane.xlu0 %1814
      %v1816 = vrot.slane %v1815, 4
      %v1817 = vadd.f32 %v1815, %v1816
      %v1818 = vrot.slane %v1817, 2
      %v1819 = vadd.f32 %v1817, %v1818
      %v1820 = vrot.slane %v1819, 1
      %v1821 = vadd.f32 %v1819, %v1820
      %v1822 = vmul.f32 %v1821, 0.015625
      %v1823 = vsub.f32 %v1811, %v1822
      %v1824 = vmul.f32 %v1823, %v1823
      %v1825 = vsel %vm1812, %v1824, 0.0
      %1826 = vadd.xlane.f32.xlu0 %v1825
      %v1827 = vpop.xlane.xlu0 %1826
      %v1828 = vrot.slane %v1827, 4
      %v1829 = vadd.f32 %v1827, %v1828
      %v1830 = vrot.slane %v1829, 2
      %v1831 = vadd.f32 %v1829, %v1830
      %v1832 = vrot.slane %v1831, 1
      %v1833 = vadd.f32 %v1831, %v1832
      %v1834 = vmul.f32 %v1833, 0.015625
      %v1835 = vadd.f32 %v1834, 1e-05
      %v1836 = vrsqrt.pop %v1835
      %v1837 = vmul.f32 %v1823, %v1836
      %v1838 = vlaneseq
      %v1839 = vshrl.u32 %v1838, 7
      %v1840 = vsub.s32 0, %v1839
      %v1841 = vrot.slane %v1806, %v1840
      %v1842 = vmul.f32 %v1837, %v1841
      %v1843 = vlaneseq
      %v1844 = vshrl.u32 %v1843, 7
      %v1845 = vsub.s32 0, %v1844
      %v1846 = vrot.slane %v1807, %v1845
      %v1847 = vadd.f32 %v1842, %v1846
      %v1848 = vlaneseq
      %v1849 = vshrl.u32 %v1848, 7
      %v1850 = vsub.s32 0, %v1849
      %v1851 = vrot.slane %v1805, %v1850
      %v1853 = vsel %vm1812, %v1847, 0
      %1855 = vmatprep.subr.mxu0 0.0
      %1856 = vmatpush1.msra.mxu0 %v1803
      %1857 = vmatprep.subr.mxu0 0.0
      %1858 = vmatpush1.msra.mxu0 0.0
      %1859 = vmatprep.subr.mxu0 0.0
      %1860 = vmatpush1.msra.mxu0 0.0
      %1861 = vmatprep.subr.mxu0 0.0
      %1862 = vmatpush1.msra.mxu0 0.0
      %1863 = vmatprep.subr.mxu0 0.0
      %1864 = vmatpush1.msra.mxu0 0.0
      %1865 = vmatprep.subr.mxu0 0.0
      %1866 = vmatpush1.msra.mxu0 0.0
      %1867 = vmatprep.subr.mxu0 0.0
      %1868 = vmatpush1.msra.mxu0 0.0
      %1869 = vmatprep.subr.mxu0 0.0
      %1870 = vmatpush1.msra.mxu0 0.0
      %1871 = vmatprep.subr.mxu0 0.0
      %1872 = vmatpush1.msra.mxu0 0.0
      %1873 = vmatprep.subr.mxu0 0.0
      %1874 = vmatpush1.msra.mxu0 0.0
      %1875 = vmatprep.subr.mxu0 0.0
      %1876 = vmatpush1.msra.mxu0 0.0
      %1877 = vmatprep.subr.mxu0 0.0
      %1878 = vmatpush1.msra.mxu0 0.0
      %1879 = vmatprep.subr.mxu0 0.0
      %1880 = vmatpush1.msra.mxu0 0.0
      %1881 = vmatprep.subr.mxu0 0.0
      %1882 = vmatpush1.msra.mxu0 0.0
      %1883 = vmatprep.subr.mxu0 0.0
      %1884 = vmatpush1.msra.mxu0 0.0
      %1885 = vmatprep.subr.mxu0 0.0
      %1886 = vmatpush1.msra.mxu0 0.0
      %1887 = vmatprep.subr.mxu0 0.0
      %1888 = vmatpush1.msra.mxu0 0.0
      %1889 = vmatprep.subr.mxu0 0.0
      %1890 = vmatpush1.msra.mxu0 0.0
      %1891 = vmatprep.subr.mxu0 0.0
      %1892 = vmatpush1.msra.mxu0 0.0
      %1893 = vmatprep.subr.mxu0 0.0
      %1894 = vmatpush1.msra.mxu0 0.0
      %1895 = vmatprep.subr.mxu0 0.0
      %1896 = vmatpush1.msra.mxu0 0.0
      %1897 = vmatprep.subr.mxu0 0.0
      %1898 = vmatpush1.msra.mxu0 0.0
      %1899 = vmatprep.subr.mxu0 0.0
      %1900 = vmatpush1.msra.mxu0 0.0
      %1901 = vmatprep.subr.mxu0 0.0
      %1902 = vmatpush1.msra.mxu0 0.0
      %1903 = vmatprep.subr.mxu0 0.0
      %1904 = vmatpush1.msra.mxu0 0.0
      %1905 = vmatprep.subr.mxu0 0.0
      %1906 = vmatpush1.msra.mxu0 0.0
      %1907 = vmatprep.subr.mxu0 0.0
      %1908 = vmatpush1.msra.mxu0 0.0
      %1909 = vmatprep.subr.mxu0 0.0
      %1910 = vmatpush1.msra.mxu0 0.0
      %1911 = vmatprep.subr.mxu0 0.0
      %1912 = vmatpush1.msra.mxu0 0.0
      %1913 = vmatprep.subr.mxu0 0.0
      %1914 = vmatpush1.msra.mxu0 0.0
      %1915 = vmatprep.subr.mxu0 0.0
      %1916 = vmatpush1.msra.mxu0 0.0
      %1917 = vmatprep.subr.mxu0 0.0
      %1918 = vmatpush1.msra.mxu0 0.0
      %1919 = vmatprep.mubr.f32.mxu0 0.0
      %1920 = vmatmul.mubr.f32.gmra.mrb[0].mxu0 %v1853
      %v1921 = vpop.f32.mrb[0].mxu0
      %v1922 = vadd.f32 %v1851, %v1921
      %v1923 = vpop.f32.mrb[0].mxu0
      %1924 = vdwg.mxu0
      %v1925 = vmax.f32 %v1922, 0.0
      %v1926 = vlaneseq
      %v1927 = vshrl.u32 %v1926, 7
      %v1928 = vsub.s32 0, %v1927
      %v1929 = vrot.slane %v1808, %v1928
      %1930 = vmatprep.subr.mxu0 0.0
      %1931 = vmatpush1.xpose.msra.mxu0 %v1804
      %1932 = vmatprep.subr.mxu0 0.0
      %1933 = vmatpush1.xpose.msra.mxu0 0.0
      %1934 = vmatprep.subr.mxu0 0.0
      %1935 = vmatpush1.xpose.msra.mxu0 0.0
      %1936 = vmatprep.subr.mxu0 0.0
      %1937 = vmatpush1.xpose.msra.mxu0 0.0
      %1938 = vmatprep.subr.mxu0 0.0
      %1939 = vmatpush1.xpose.msra.mxu0 0.0
      %1940 = vmatprep.subr.mxu0 0.0
      %1941 = vmatpush1.xpose.msra.mxu0 0.0
      %1942 = vmatprep.subr.mxu0 0.0
      %1943 = vmatpush1.xpose.msra.mxu0 0.0
      %1944 = vmatprep.subr.mxu0 0.0
      %1945 = vmatpush1.xpose.msra.mxu0 0.0
      %1946 = vmatprep.subr.mxu0 0.0
      %1947 = vmatpush1.xpose.msra.mxu0 0.0
      %1948 = vmatprep.subr.mxu0 0.0
      %1949 = vmatpush1.xpose.msra.mxu0 0.0
      %1950 = vmatprep.subr.mxu0 0.0
      %1951 = vmatpush1.xpose.msra.mxu0 0.0
      %1952 = vmatprep.subr.mxu0 0.0
      %1953 = vmatpush1.xpose.msra.mxu0 0.0
      %1954 = vmatprep.subr.mxu0 0.0
      %1955 = vmatpush1.xpose.msra.mxu0 0.0
      %1956 = vmatprep.subr.mxu0 0.0
      %1957 = vmatpush1.xpose.msra.mxu0 0.0
      %1958 = vmatprep.subr.mxu0 0.0
      %1959 = vmatpush1.xpose.msra.mxu0 0.0
      %1960 = vmatprep.subr.mxu0 0.0
      %1961 = vmatpush1.xpose.msra.mxu0 0.0
      %1962 = vmatprep.subr.mxu0 0.0
      %1963 = vmatpush1.xpose.msra.mxu0 0.0
      %1964 = vmatprep.subr.mxu0 0.0
      %1965 = vmatpush1.xpose.msra.mxu0 0.0
      %1966 = vmatprep.subr.mxu0 0.0
      %1967 = vmatpush1.xpose.msra.mxu0 0.0
      %1968 = vmatprep.subr.mxu0 0.0
      %1969 = vmatpush1.xpose.msra.mxu0 0.0
      %1970 = vmatprep.subr.mxu0 0.0
      %1971 = vmatpush1.xpose.msra.mxu0 0.0
      %1972 = vmatprep.subr.mxu0 0.0
      %1973 = vmatpush1.xpose.msra.mxu0 0.0
      %1974 = vmatprep.subr.mxu0 0.0
      %1975 = vmatpush1.xpose.msra.mxu0 0.0
      %1976 = vmatprep.subr.mxu0 0.0
      %1977 = vmatpush1.xpose.msra.mxu0 0.0
      %1978 = vmatprep.subr.mxu0 0.0
      %1979 = vmatpush1.xpose.msra.mxu0 0.0
      %1980 = vmatprep.subr.mxu0 0.0
      %1981 = vmatpush1.xpose.msra.mxu0 0.0
      %1982 = vmatprep.subr.mxu0 0.0
      %1983 = vmatpush1.xpose.msra.mxu0 0.0
      %1984 = vmatprep.subr.mxu0 0.0
      %1985 = vmatpush1.xpose.msra.mxu0 0.0
      %1986 = vmatprep.subr.mxu0 0.0
      %1987 = vmatpush1.xpose.msra.mxu0 0.0
      %1988 = vmatprep.subr.mxu0 0.0
      %1989 = vmatpush1.xpose.msra.mxu0 0.0
      %1990 = vmatprep.subr.mxu0 0.0
      %1991 = vmatpush1.xpose.msra.mxu0 0.0
      %1992 = vmatprep.subr.mxu0 0.0
      %1993 = vmatpush1.xpose.msra.mxu0 0.0
      %1994 = vmatprep.mubr.f32.mxu0 0.0
      %1995 = vmatmul.mubr.f32.gmra.mrb[0].mxu0 %v1925
      %v1996 = vpop.f32.mrb[0].mxu0
      %v1997 = vadd.f32 %v1929, %v1996
      %v1998 = vpop.f32.mrb[0].mxu0
      %1999 = vdwg.mxu0
      %v2000 = vadd.f32 %v1847, %v1997
      %v2001 = vsel %vm1812, %v2000, 0.0
      %2002 = vadd.xlane.f32.xlu0 %v2001
      %v2003 = vpop.xlane.xlu0 %2002
      %v2004 = vrot.slane %v2003, 4
      %v2005 = vadd.f32 %v2003, %v2004
      %v2006 = vrot.slane %v2005, 2
      %v2007 = vadd.f32 %v2005, %v2006
      %v2008 = vrot.slane %v2007, 1
      %v2009 = vadd.f32 %v2007, %v2008
      %v2010 = vmul.f32 %v2009, 0.015625
      %v2011 = vsub.f32 %v2000, %v2010
      %v2012 = vmul.f32 %v2011, %v2011
      %v2013 = vsel %vm1812, %v2012, 0.0
      %2014 = vadd.xlane.f32.xlu0 %v2013
      %v2015 = vpop.xlane.xlu0 %2014
      %v2016 = vrot.slane %v2015, 4
      %v2017 = vadd.f32 %v2015, %v2016
      %v2018 = vrot.slane %v2017, 2
      %v2019 = vadd.f32 %v2017, %v2018
      %v2020 = vrot.slane %v2019, 1
      %v2021 = vadd.f32 %v2019, %v2020
      %v2022 = vmul.f32 %v2021, 0.015625
      %v2023 = vadd.f32 %v2022, 1e-05
      %v2024 = vrsqrt.pop %v2023
      %v2025 = vmul.f32 %v2011, %v2024
      %v2026 = vlaneseq
      %v2027 = vshrl.u32 %v2026, 7
      %v2028 = vsub.s32 0, %v2027
      %v2029 = vrot.slane %v1809, %v2028
      %v2030 = vmul.f32 %v2025, %v2029
      %v2031 = vlaneseq
      %v2032 = vshrl.u32 %v2031, 7
      %v2033 = vsub.s32 0, %v2032
      %v2034 = vrot.slane %v1810, %v2033
      %v2035 = vadd.f32 %v2030, %v2034
      %2037 = vrot.lane.b32.xlu0 %v2035, 32
      %v2038 = vpop.permute.xlu0 %2037
      %v2040 = vsel %vm396, %v1802, %v2038
      %2041 = vst.msk [vmem:[%s388] sm:$0xff] %vm786, %v2040
      %p2042 = scmp.lt.s32.totalorder %s21, 1
      %s2043 = scalar_select %p2042, %s21, 1
      %s2044 = smul.addr %s2043, 8
      %s2045 = scalar_lea.vmem %s10, %s2044
      // Predicated region
      $region61: #{encoding_block.1} parent=59 // pred_check
        %p2046 = pneg %p264
      $region62: #{encoding_block.1} parent=59 // pred_check_branch
        %2048 = sbr.rel (%p2046) target = $region64
      $region63: #{encoding_block.1} parent=59 // pred_region
        _
      $region64: #{encoding_block.1} parent=59 // pred_fallthru
        _
    $region60: #{encoding_block.1} parent=5 // pred_fallthru
      _
    %p2049 = scmp.le.s32.totalorder 2, %s16
    // Predicated region
    $region65: #{encoding_block.1} parent=5 // pred_check
      %p2050 = pneg %p2049
    $region66: #{encoding_block.1} parent=5 // pred_check_branch
      %2052 = sbr.rel (%p2050) target = $region68
    $region67: #{encoding_block.1} parent=5 // pred_region
      %s2053 = ssub.s32 %s16, 2
      // Predicated region
      $region69: #{encoding_block.1} parent=67 // pred_check
        %p2054 = pneg %p270
      $region70: #{encoding_block.1} parent=67 // pred_check_branch
        %2056 = sbr.rel (%p2054) target = $region72
      $region71: #{encoding_block.1} parent=67 // pred_region
        %p2057 = scmp.lt.s32.totalorder %s22, 1
        %s2058 = scalar_select %p2057, %s22, 1
        %s2059 = smul.addr %s2058, 8
        %s2060 = scalar_lea.vmem %s10, %s2059
      $region72: #{encoding_block.1} parent=67 // pred_fallthru
        _
    $region68: #{encoding_block.1} parent=5 // pred_fallthru
      _
  $region6: #{encoding_block.1} parent=0 // loop_footer
    %s20 = sadd.s32 1, %s16
  $region7: #{encoding_block.1} parent=0 // loop_footer_branch
    %15 = sbr.rel target = $region3
  $region8: #{encoding_block.1} parent=0 // loop_exit
    _

</llo_original>
